<compile_context>
chip_gen: v7x
topology: tpu7x:2x2x1
jax: 0.10.0
libtpu: 0.0.40
codegen_flags: <defaults>
</compile_context>

<pallas_src>
import functools

import jax
import jax.numpy as jnp
import numpy as np
from jax.experimental import pallas as pl
from jax.experimental.pallas import tpu as pltpu


def _ffn_kernel(x_ref, w1_ref, w2_ref, o_ref, acc_ref):
    """One (tm rows, th hidden-cols) step of the fused FFN.

    acc += relu(x_tile @ W1[:, j*th:(j+1)*th])^2 @ W2[j*th:(j+1)*th, :]
    Output is written once, on the last hidden chunk.
    """
    j = pl.program_id(1)

    @pl.when(j == 0)
    def _init():
        acc_ref[...] = jnp.zeros_like(acc_ref)

    # First matmul on the MXU: bf16 operands, f32 accumulation.
    h = jnp.dot(x_ref[...], w1_ref[...], preferred_element_type=jnp.float32)
    # ReLU^2 epilogue in f32 (VPU) — the (tm, th) intermediate stays in VMEM/vregs.
    h = jnp.maximum(h, 0.0)
    h = h * h
    # Second matmul: reduce this hidden chunk straight into the f32 accumulator.
    acc_ref[...] += jnp.dot(h.astype(w2_ref.dtype), w2_ref[...],
                            preferred_element_type=jnp.float32)

    @pl.when(j == pl.num_programs(1) - 1)
    def _finalize():
        o_ref[...] = acc_ref[...].astype(o_ref.dtype)


def ffn_forward(x, w1, w2, *, block_m=256, block_h=512, out_dtype=jnp.float32):
    """Fused FFN forward.

    x  : (..., d_model) float32
    w1 : (d_model, 4*d_model)   -- torch nn.Linear weight pre-transposed (in, out)
    w2 : (4*d_model, d_model)   -- pre-transposed (in, out)
    """
    orig_shape = x.shape
    D = orig_shape[-1]
    H = w1.shape[1]
    assert w1.shape == (D, H) and w2.shape == (H, D)

    x2 = x.reshape(-1, D)
    M = x2.shape[0]
    tm = min(block_m, M)
    th = min(block_h, H)
    assert M % tm == 0 and H % th == 0, "demo assumes tile-divisible shapes"

    # bf16 operands for the MXU; accumulation stays f32 inside the kernel.
    xb = x2.astype(jnp.bfloat16)
    w1b = w1.astype(jnp.bfloat16)
    w2b = w2.astype(jnp.bfloat16)

    grid = (M // tm, H // th)  # rows parallel, hidden-reduction axis last

    out = pl.pallas_call(
        _ffn_kernel,
        out_shape=jax.ShapeDtypeStruct((M, D), out_dtype),
        grid_spec=pltpu.PrefetchScalarGridSpec(
            num_scalar_prefetch=0,
            grid=grid,
            in_specs=[
                pl.BlockSpec((tm, D), lambda i, j: (i, 0)),   # activations
                pl.BlockSpec((D, th), lambda i, j: (0, j)),   # W1 column chunk
                pl.BlockSpec((th, D), lambda i, j: (j, 0)),   # W2 row chunk
            ],
            out_specs=pl.BlockSpec((tm, D), lambda i, j: (i, 0)),
            scratch_shapes=[pltpu.VMEM((tm, D), jnp.float32)],  # f32 accumulator
        ),
        compiler_params=pltpu.CompilerParams(
            dimension_semantics=("parallel", "arbitrary"),
            vmem_limit_bytes=64 * 1024 * 1024,
        ),
    )(xb, w1b, w2b)

    return out.reshape(orig_shape[:-1] + (D,))


if __name__ == "__main__":
    key = jax.random.PRNGKey(0)
    kx, k1, k2 = jax.random.split(key, 3)

    # Small shapes consistent with the module (train.py uses d_model=1024,
    # batch=32, context=64; scaled down here).
    B, T, D = 8, 64, 256
    H = 4 * D

    x = jax.random.normal(kx, (B, T, D), dtype=jnp.float32)
    # torch nn.Linear stores weight as (out, in); we pass the (in, out) transpose.
    w1 = 0.02 * jax.random.normal(k1, (D, H), dtype=jnp.float32)
    w2 = 0.02 * jax.random.normal(k2, (H, D), dtype=jnp.float32)

    out = jax.jit(ffn_forward)(x, w1, w2)
    jax.block_until_ready(out)

    # Reference computed with the same bf16 operands / f32 accumulation.
    xb = x.reshape(-1, D).astype(jnp.bfloat16)
    h_ref = jnp.dot(xb, w1.astype(jnp.bfloat16), preferred_element_type=jnp.float32)
    h_ref = jnp.maximum(h_ref, 0.0) ** 2
    ref = jnp.dot(h_ref.astype(jnp.bfloat16), w2.astype(jnp.bfloat16),
                  preferred_element_type=jnp.float32).reshape(B, T, D)

    assert out.shape == (B, T, D)
    assert out.dtype == jnp.float32
    assert bool(jnp.isfinite(out).all())
    np.testing.assert_allclose(np.asarray(out), np.asarray(ref), rtol=5e-2, atol=5e-3)
    print("KERNEL_OK")
</pallas_src>

<mosaic_0001>
module attributes {stable_mosaic.version = 11 : i64} {
  func.func @_ffn_kernel(%arg0: i32, %arg1: i32, %arg2: memref<256x256xbf16, #tpu.memory_space<vmem>>, %arg3: memref<256x512xbf16, #tpu.memory_space<vmem>>, %arg4: memref<512x256xbf16, #tpu.memory_space<vmem>>, %arg5: memref<256x256xf32, #tpu.memory_space<vmem>>, %arg6: memref<256x256xf32, #tpu.memory_space<vmem>>) attributes {dimension_semantics = [#tpu.dimension_semantics<parallel>, #tpu.dimension_semantics<arbitrary>], iteration_bounds = array<i64: 2, 2>, scalar_prefetch = 0 : i64, scratch_operands = 1 : i64, tpu.core_type = #tpu.core_type<tc>, window_params = [{transform_indices = @transform_0, window_bounds = array<i64: 256, 256>}, {transform_indices = @transform_1, window_bounds = array<i64: 256, 512>}, {transform_indices = @transform_2, window_bounds = array<i64: 512, 256>}, {transform_indices = @transform_3, window_bounds = array<i64: 256, 256>}]} {
    %c0_i32 = arith.constant 0 : i32
    %0 = arith.cmpi eq, %arg1, %c0_i32 : i32
    %1 = arith.extui %0 : i1 to i32
    %c0_i32_0 = arith.constant 0 : i32
    %2 = arith.cmpi ne, %1, %c0_i32_0 : i32
    scf.if %2 {
      %cst_13 = arith.constant 0.000000e+00 : f32
      %18 = vector.broadcast %cst_13 : f32 to vector<256x256xf32>
      %c0_14 = arith.constant 0 : index
      %c0_15 = arith.constant 0 : index
      %19 = vector.load %arg6[%c0_14, %c0_15] : memref<256x256xf32, #tpu.memory_space<vmem>>, vector<256x256xf32>
      tpu.vector_store %arg6[%c0_14, %c0_15], %18 {strides = array<i32>} : memref<256x256xf32, #tpu.memory_space<vmem>>, vector<256x256xf32>,
    } else {
    }
    %c0 = arith.constant 0 : index
    %c0_1 = arith.constant 0 : index
    %3 = vector.load %arg2[%c0, %c0_1] : memref<256x256xbf16, #tpu.memory_space<vmem>>, vector<256x256xbf16>
    %c0_2 = arith.constant 0 : index
    %c0_3 = arith.constant 0 : index
    %4 = vector.load %arg3[%c0_2, %c0_3] : memref<256x512xbf16, #tpu.memory_space<vmem>>, vector<256x512xbf16>
    %cst = arith.constant dense<0.000000e+00> : vector<256x512xf32>
    %5 = tpu.matmul %3, %4, %cst {dimension_numbers = #tpu.dot_dimension_numbers<[1], [0], [0], [1], [0, 0, 1, 1], [], []>} : vector<256x256xbf16>, vector<256x512xbf16>, vector<256x512xf32> -> vector<256x512xf32>
    %cst_4 = arith.constant 0.000000e+00 : f32
    %6 = vector.broadcast %cst_4 : f32 to vector<256x512xf32>
    %7 = arith.maximumf %5, %6 : vector<256x512xf32>
    %8 = arith.mulf %7, %7 : vector<256x512xf32>
    %c0_5 = arith.constant 0 : index
    %c0_6 = arith.constant 0 : index
    %9 = vector.load %arg6[%c0_5, %c0_6] : memref<256x256xf32, #tpu.memory_space<vmem>>, vector<256x256xf32>
    %10 = arith.truncf %8 : vector<256x512xf32> to vector<256x512xbf16>
    %c0_7 = arith.constant 0 : index
    %c0_8 = arith.constant 0 : index
    %11 = vector.load %arg4[%c0_7, %c0_8] : memref<512x256xbf16, #tpu.memory_space<vmem>>, vector<512x256xbf16>
    %cst_9 = arith.constant dense<0.000000e+00> : vector<256x256xf32>
    %12 = tpu.matmul %10, %11, %cst_9 {dimension_numbers = #tpu.dot_dimension_numbers<[1], [0], [0], [1], [0, 0, 1, 1], [], []>} : vector<256x512xbf16>, vector<512x256xbf16>, vector<256x256xf32> -> vector<256x256xf32>
    %13 = arith.addf %9, %12 : vector<256x256xf32>
    %c0_10 = arith.constant 0 : index
    %c0_11 = arith.constant 0 : index
    %14 = vector.load %arg6[%c0_10, %c0_11] : memref<256x256xf32, #tpu.memory_space<vmem>>, vector<256x256xf32>
    tpu.vector_store %arg6[%c0_10, %c0_11], %13 {strides = array<i32>} : memref<256x256xf32, #tpu.memory_space<vmem>>, vector<256x256xf32>,
    %c1_i32 = arith.constant 1 : i32
    %15 = arith.cmpi eq, %arg1, %c1_i32 : i32
    %16 = arith.extui %15 : i1 to i32
    %c0_i32_12 = arith.constant 0 : i32
    %17 = arith.cmpi ne, %16, %c0_i32_12 : i32
    scf.if %17 {
      %c0_13 = arith.constant 0 : index
      %c0_14 = arith.constant 0 : index
      %18 = vector.load %arg6[%c0_13, %c0_14] : memref<256x256xf32, #tpu.memory_space<vmem>>, vector<256x256xf32>
      %c0_15 = arith.constant 0 : index
      %c0_16 = arith.constant 0 : index
      %19 = vector.load %arg5[%c0_15, %c0_16] : memref<256x256xf32, #tpu.memory_space<vmem>>, vector<256x256xf32>
      tpu.vector_store %arg5[%c0_15, %c0_16], %18 {strides = array<i32>} : memref<256x256xf32, #tpu.memory_space<vmem>>, vector<256x256xf32>,
    } else {
    }
    return
  }
  func.func @transform_0(%arg0: i32, %arg1: i32) -> (i32, i32) {
    %c0_i32 = arith.constant 0 : i32
    %c0_i32_0 = arith.constant 0 : i32
    return %arg0, %c0_i32 : i32, i32
  }
  func.func @transform_1(%arg0: i32, %arg1: i32) -> (i32, i32) {
    %c0_i32 = arith.constant 0 : i32
    %c0_i32_0 = arith.constant 0 : i32
    return %c0_i32, %arg1 : i32, i32
  }
  func.func @transform_2(%arg0: i32, %arg1: i32) -> (i32, i32) {
    %c0_i32 = arith.constant 0 : i32
    %c0_i32_0 = arith.constant 0 : i32
    return %arg1, %c0_i32 : i32, i32
  }
  func.func @transform_3(%arg0: i32, %arg1: i32) -> (i32, i32) {
    %c0_i32 = arith.constant 0 : i32
    %c0_i32_0 = arith.constant 0 : i32
    return %arg0, %c0_i32 : i32, i32
  }
}

</mosaic_0001>

<llo_original>
// kernel: ffn_forward.1
$region0: #{ffn_forward.1}
  #allocation0 [shape = 'u32[]', space=smem, size = 0x4, offset = 0x4, fixed_abs, tag = 'smem constant byte address 0x4 - core index']
  #allocation1 [shape = 'u32[144,128]{1,0:T(1,128)}', space=vmem, size = 0x12000, scoped, tag = 'internal scratch']
  #allocation2 [shape = 'f32[256,256]{1,0:T(8,128)}', space=vmem, size = 0x40000, scoped, tag = 'scratch operand']
  %s0 = inlined_call_operand.hbm [shape: bf16[512,256], index: 0, kind: input, shape index: {}]
  %s1 = inlined_call_operand.hbm [shape: bf16[256,1024], index: 1, kind: input, shape index: {}]
  %s2 = inlined_call_operand.hbm [shape: bf16[1024,256], index: 2, kind: input, shape index: {}]
  %s3 = inlined_call_operand.hbm [shape: f32[512,256], index: 3, kind: output, shape index: {}]
  %s4 = sld [smem:[#allocation0]]
  $region65: #{ffn_forward.1} parent=0
    _
  %s6 = ssub.s32 1, %s4
  %s7 = scalar_select 0, %s6, %s4
  $region1: #{ffn_forward.1} parent=0
    #allocation3 [shape = 'u8[262144]{0}', space=vmem, size = 0x40000, scoped, tag = 'input window, operand 0']
    #allocation4 [shape = 's32[2]{0}', space=sflag, size = 0x8, scoped, tag = 'scoped memory for ffn_forward.1']
    #allocation5 [shape = 's32[2]{0}', space=sflag, size = 0x8, scoped, tag = 'scoped memory for ffn_forward.1']
    #allocation6 [shape = 'u8[524288]{0}', space=vmem, size = 0x80000, scoped, tag = 'input window, operand 1']
    #allocation7 [shape = 's32[2]{0}', space=sflag, size = 0x8, scoped, tag = 'scoped memory for ffn_forward.1']
    #allocation8 [shape = 'u8[524288]{0}', space=vmem, size = 0x80000, scoped, tag = 'input window, operand 2']
    #allocation9 [shape = 'u8[524288]{0}', space=vmem, size = 0x80000, scoped, tag = 'output window, operand 0']
    %8 = vsyncpa [#allocation4], 0
    %s9 = scalar_lea.sflag [#allocation4], 1
    %10 = vsyncpa %s9, 0
    %11 = vsyncpa [#allocation7], 0
    %s12 = scalar_lea.sflag [#allocation7], 1
    %13 = vsyncpa %s12, 0
    %14 = vsyncpa [#allocation5], 0
    %s15 = scalar_lea.sflag [#allocation5], 1
    %16 = vsyncpa %s15, 0
    loop: start=0, step=1, limit=6
    $region2: #{ffn_forward.1} parent=1 // loop_pre_header
      _
    $region3: #{ffn_forward.1} parent=1 // loop_header
      %s18 = sphi 0, %s22
      %p19 = scmp.ge.s32.totalorder %s18, 6
      %s25 = sphi 0, %s37
      %s26 = sphi 0, %s33
      %s27 = sphi 0, %s25
      %s28 = sphi 0, %s26
      %s29 = sphi 0, %s27
      %s30 = sphi 0, %s28
      %s40 = sphi 0, %s42
      %s43 = sphi 0, %s40
      %s44 = sphi 0, %s43
      %s60 = sphi 0, %s44
      %s66 = sphi 0, %s68
      %s69 = sphi 0, %s66
      %s70 = sphi 0, %s69
      %s86 = sphi 0, %s70
      %s92 = sphi 0, %s94
      %s95 = sphi 0, %s92
      %s96 = sphi 0, %s95
      %s112 = sphi 0, %s96
      %s118 = sphi 0, %s120
      %s121 = sphi 0, %s118
      %s122 = sphi 0, %s121
      %s138 = sphi 0, %s122
    $region4: #{ffn_forward.1} parent=1 // loop_header_branch
      %21 = sbr.rel (%p19) target = $region8
    $region5: #{ffn_forward.1} parent=1 // loop_body
      %s23 = ssub.s32 %s18, 1
      %s24 = ssub.s32 %s18, 2
      %s31 = sadd.s32 1, %s26
      %p32 = scmp.ge.s32.totalorder %s31, 2
      %s33 = scalar_select %p32, 0, %s31
      %s34 = sadd.s32 1, %s25
      %s35 = scalar_select %p32, %s34, %s25
      %p36 = scmp.ge.s32.totalorder %s35, 2
      %s37 = scalar_select %p36, 0, %s35
      %s38 = ssub.s32 %s25, %s37
      %p39 = scmp.eq.s32.totalorder %s38, 0
      %s41 = sadd.s32 %s40, 1
      %s42 = scalar_select %p39, %s40, %s41
      %p45 = pneg %p39
      %p46 = scmp.eq.s32.totalorder %s18, 3
      %p47 = por %p45, %p46
      %p48 = scmp.ne.s32.totalorder %s40, %s43
      %p49 = scmp.eq.s32.totalorder %s18, 0
      %p50 = por %p48, %p49
      %p51 = scmp.ne.s32.totalorder %s40, %s43
      %p52 = scmp.eq.s32.totalorder %s23, 3
      %p53 = por %p51, %p52
      %p54 = scmp.ne.s32.totalorder %s43, %s44
      %p55 = scmp.eq.s32.totalorder %s23, 0
      %p56 = por %p54, %p55
      %p57 = scmp.ne.s32.totalorder %s43, %s44
      %p58 = scmp.eq.s32.totalorder %s24, 3
      %p59 = por %p57, %p58
      %p61 = scmp.ne.s32.totalorder %s44, %s60
      %p62 = scmp.eq.s32.totalorder %s24, 0
      %p63 = por %p61, %p62
      %s64 = ssub.s32 %s26, %s33
      %p65 = scmp.eq.s32.totalorder %s64, 0
      %s67 = sadd.s32 %s66, 1
      %s68 = scalar_select %p65, %s66, %s67
      %p71 = pneg %p65
      %p72 = scmp.eq.s32.totalorder %s18, 3
      %p73 = por %p71, %p72
      %p74 = scmp.ne.s32.totalorder %s66, %s69
      %p75 = scmp.eq.s32.totalorder %s18, 0
      %p76 = por %p74, %p75
      %p77 = scmp.ne.s32.totalorder %s66, %s69
      %p78 = scmp.eq.s32.totalorder %s23, 3
      %p79 = por %p77, %p78
      %p80 = scmp.ne.s32.totalorder %s69, %s70
      %p81 = scmp.eq.s32.totalorder %s23, 0
      %p82 = por %p80, %p81
      %p83 = scmp.ne.s32.totalorder %s69, %s70
      %p84 = scmp.eq.s32.totalorder %s24, 3
      %p85 = por %p83, %p84
      %p87 = scmp.ne.s32.totalorder %s70, %s86
      %p88 = scmp.eq.s32.totalorder %s24, 0
      %p89 = por %p87, %p88
      %s90 = ssub.s32 %s26, %s33
      %p91 = scmp.eq.s32.totalorder %s90, 0
      %s93 = sadd.s32 %s92, 1
      %s94 = scalar_select %p91, %s92, %s93
      %p97 = pneg %p91
      %p98 = scmp.eq.s32.totalorder %s18, 3
      %p99 = por %p97, %p98
      %p100 = scmp.ne.s32.totalorder %s92, %s95
      %p101 = scmp.eq.s32.totalorder %s18, 0
      %p102 = por %p100, %p101
      %p103 = scmp.ne.s32.totalorder %s92, %s95
      %p104 = scmp.eq.s32.totalorder %s23, 3
      %p105 = por %p103, %p104
      %p106 = scmp.ne.s32.totalorder %s95, %s96
      %p107 = scmp.eq.s32.totalorder %s23, 0
      %p108 = por %p106, %p107
      %p109 = scmp.ne.s32.totalorder %s95, %s96
      %p110 = scmp.eq.s32.totalorder %s24, 3
      %p111 = por %p109, %p110
      %p113 = scmp.ne.s32.totalorder %s96, %s112
      %p114 = scmp.eq.s32.totalorder %s24, 0
      %p115 = por %p113, %p114
      %s116 = ssub.s32 %s25, %s37
      %p117 = scmp.eq.s32.totalorder %s116, 0
      %s119 = sadd.s32 %s118, 1
      %s120 = scalar_select %p117, %s118, %s119
      %p123 = pneg %p117
      %p124 = scmp.eq.s32.totalorder %s18, 3
      %p125 = por %p123, %p124
      %p126 = scmp.ne.s32.totalorder %s118, %s121
      %p127 = scmp.eq.s32.totalorder %s18, 0
      %p128 = por %p126, %p127
      %p129 = scmp.ne.s32.totalorder %s118, %s121
      %p130 = scmp.eq.s32.totalorder %s23, 3
      %p131 = por %p129, %p130
      %p132 = scmp.ne.s32.totalorder %s121, %s122
      %p133 = scmp.eq.s32.totalorder %s23, 0
      %p134 = por %p132, %p133
      %p135 = scmp.ne.s32.totalorder %s121, %s122
      %p136 = scmp.eq.s32.totalorder %s24, 3
      %p137 = por %p135, %p136
      %p139 = scmp.ne.s32.totalorder %s122, %s138
      %p140 = scmp.eq.s32.totalorder %s24, 0
      %p141 = por %p139, %p140
      %p142 = scmp.le.s32.totalorder 1, %s18
      %p143 = scmp.lt.s32.totalorder %s18, 5
      %p144 = pnand %p142, %p143
      %p145 = pneg %p144
      // Predicated region
      $region9: #{ffn_forward.1} parent=5 // pred_check
        _
      $region10: #{ffn_forward.1} parent=5 // pred_check_branch
        %147 = sbr.rel (%p144) target = $region12
      $region11: #{ffn_forward.1} parent=5 // pred_region
        %s148 = ssub.s32 %s18, 1
      $region12: #{ffn_forward.1} parent=5 // pred_fallthru
        _
      %p149 = scmp.lt.s32.totalorder %s18, 4
      // Predicated region
      $region13: #{ffn_forward.1} parent=5 // pred_check
        %p150 = pneg %p149
      $region14: #{ffn_forward.1} parent=5 // pred_check_branch
        %152 = sbr.rel (%p150) target = $region16
      $region15: #{ffn_forward.1} parent=5 // pred_region
        // Predicated region
        $region17: #{ffn_forward.1} parent=15 // pred_check
          %p153 = pneg %p50
        $region18: #{ffn_forward.1} parent=15 // pred_check_branch
          %155 = sbr.rel (%p153) target = $region20
        $region19: #{ffn_forward.1} parent=15 // pred_region
          %s156 = sand.u32 %s40, 1
          %s157 = scalar_lea.sflag [#allocation4], %s156
          %s158 = sand.u32 %s40, 1
          %s159 = smul.addr %s158, 256
          %s160 = scalar_lea.vmem [#allocation3], %s159
          %s161 = smul.u32 32, %s25
          %s163 = ssub.s32 4096, 4096
          %164 = vsyncadd %s157, %s163
          %s165 = smul.addr %s161, 2
          %s166 = smul.addr %s165, 64
          %s167 = scalar_lea.hbm %s0, %s166
          %s168 = sshll.u32 %s160, 4
          %s169 = int_to_ptr.vmem [resolvable:$true] %s168
          %174 = dma.hbm_to_vmem [thread:$0]  %s167, 4096, %s169, %s157, 128, 128, 8
        $region20: #{ffn_forward.1} parent=15 // pred_fallthru
          _
        // Predicated region
        $region21: #{ffn_forward.1} parent=15 // pred_check
          %p175 = pneg %p76
        $region22: #{ffn_forward.1} parent=15 // pred_check_branch
          %177 = sbr.rel (%p175) target = $region24
        $region23: #{ffn_forward.1} parent=15 // pred_region
          %s178 = sand.u32 %s18, 1
          %s179 = scalar_lea.sflag [#allocation7], %s178
          %s180 = sand.u32 %s66, 1
          %s181 = smul.addr %s180, 512
          %s182 = scalar_lea.vmem [#allocation6], %s181
          %s183 = smul.u32 4, %s26
          %s185 = ssub.s32 8192, 8192
          %186 = vsyncadd %s179, %s185
          %s187 = smul.addr %s183, 64
          %s188 = scalar_lea.hbm %s1, %s187
          %s189 = sshll.u32 %s182, 4
          %s190 = int_to_ptr.vmem [resolvable:$true] %s189
          %195 = dma.hbm_to_vmem [thread:$0]  %s188, 8192, %s190, %s179, 512, 256, 16
        $region24: #{ffn_forward.1} parent=15 // pred_fallthru
          _
        // Predicated region
        $region25: #{ffn_forward.1} parent=15 // pred_check
          %p196 = pneg %p102
        $region26: #{ffn_forward.1} parent=15 // pred_check_branch
          %198 = sbr.rel (%p196) target = $region28
        $region27: #{ffn_forward.1} parent=15 // pred_region
          %s199 = sand.u32 %s18, 1
          %s200 = scalar_lea.sflag [#allocation7], %s199
          %s201 = sand.u32 %s92, 1
          %s202 = smul.addr %s201, 512
          %s203 = scalar_lea.vmem [#allocation8], %s202
          %s204 = smul.u32 64, %s26
          %s206 = ssub.s32 8192, 8192
          %207 = vsyncadd %s200, %s206
          %s208 = smul.addr %s204, 2
          %s209 = smul.addr %s208, 64
          %s210 = scalar_lea.hbm %s2, %s209
          %s211 = sshll.u32 %s203, 4
          %s212 = int_to_ptr.vmem [resolvable:$true] %s211
          %217 = dma.hbm_to_vmem [thread:$0]  %s210, 8192, %s212, %s200, 128, 128, 8
        $region28: #{ffn_forward.1} parent=15 // pred_fallthru
          _
      $region16: #{ffn_forward.1} parent=5 // pred_fallthru
        _
      %p218 = scmp.le.s32.totalorder 1, %s18
      %p219 = scmp.lt.s32.totalorder %s18, 5
      %p220 = pnand %p218, %p219
      %p221 = pneg %p220
      // Predicated region
      $region29: #{ffn_forward.1} parent=5 // pred_check
        _
      $region30: #{ffn_forward.1} parent=5 // pred_check_branch
        %223 = sbr.rel (%p220) target = $region32
      $region31: #{ffn_forward.1} parent=5 // pred_region
        %s224 = ssub.s32 %s18, 1
        %s225 = sand.u32 %s43, 1
        %s226 = scalar_lea.sflag [#allocation4], %s225
        %s227 = sand.u32 %s43, 1
        %s228 = smul.addr %s227, 256
        %s229 = scalar_lea.vmem [#allocation3], %s228
        // Predicated region
        $region33: #{ffn_forward.1} parent=31 // pred_check
          %p230 = pneg %p56
        $region34: #{ffn_forward.1} parent=31 // pred_check_branch
          %232 = sbr.rel (%p230) target = $region36
        $region35: #{ffn_forward.1} parent=31 // pred_region
          %233 = dma.done %s226, 4096
        $region36: #{ffn_forward.1} parent=31 // pred_fallthru
          _
        %s234 = sand.u32 %s23, 1
        %s235 = scalar_lea.sflag [#allocation7], %s234
        %s236 = sand.u32 %s69, 1
        %s237 = smul.addr %s236, 512
        %s238 = scalar_lea.vmem [#allocation6], %s237
        // Predicated region
        $region37: #{ffn_forward.1} parent=31 // pred_check
          %p239 = pneg %p82
        $region38: #{ffn_forward.1} parent=31 // pred_check_branch
          %241 = sbr.rel (%p239) target = $region40
        $region39: #{ffn_forward.1} parent=31 // pred_region
          %242 = dma.done %s235, 8192
        $region40: #{ffn_forward.1} parent=31 // pred_fallthru
          _
        %s243 = sand.u32 %s23, 1
        %s244 = scalar_lea.sflag [#allocation7], %s243
        %s245 = sand.u32 %s95, 1
        %s246 = smul.addr %s245, 512
        %s247 = scalar_lea.vmem [#allocation8], %s246
        // Predicated region
        $region41: #{ffn_forward.1} parent=31 // pred_check
          %p248 = pneg %p108
        $region42: #{ffn_forward.1} parent=31 // pred_check_branch
          %250 = sbr.rel (%p248) target = $region44
        $region43: #{ffn_forward.1} parent=31 // pred_region
          %251 = dma.done %s244, 8192
        $region44: #{ffn_forward.1} parent=31 // pred_fallthru
          _
        %s252 = sand.u32 %s43, 1
        %s253 = scalar_lea.sflag [#allocation4], %s252
        %s254 = sand.u32 %s43, 1
        %s255 = smul.addr %s254, 256
        %s256 = scalar_lea.vmem [#allocation3], %s255
        %p257 = pneg %p56
        %p258 = pneg %p53
        %s259 = sand.u32 %s23, 1
        %s260 = scalar_lea.sflag [#allocation7], %s259
        %s261 = sand.u32 %s69, 1
        %s262 = smul.addr %s261, 512
        %s263 = scalar_lea.vmem [#allocation6], %s262
        %p264 = pneg %p82
        %p265 = pneg %p79
        %s266 = sand.u32 %s23, 1
        %s267 = scalar_lea.sflag [#allocation7], %s266
        %s268 = sand.u32 %s95, 1
        %s269 = smul.addr %s268, 512
        %s270 = scalar_lea.vmem [#allocation8], %s269
        %p271 = pneg %p108
        %p272 = pneg %p105
        %p273 = pneg %p134
        %p274 = pneg %p131
        %s275 = sand.u32 %s121, 1
        %s276 = scalar_lea.sflag [#allocation5], %s275
        %s277 = sand.u32 %s121, 1
        %s278 = smul.addr %s277, 512
        %s279 = scalar_lea.vmem [#allocation9], %s278
        %s280 = smul.u32 32, %s27
        %s281 = smul.u32 4, %s28
        %s282 = smul.u32 64, %s28
        %s283 = smul.u32 32, %s27
        %p284 = scmp.eq.s32.totalorder %s28, 0
        // Predicated region
        $region45: #{ffn_forward.1} parent=31 // pred_check
          %p285 = pneg %p284
        $region46: #{ffn_forward.1} parent=31 // pred_check_branch
          %287 = sbr.rel (%p285) target = $region48
        $region47: #{ffn_forward.1} parent=31 // pred_region
          %288 = vst [vmem:[#allocation2] sm:$0xff] 0.0
          %289 = vst [vmem:[#allocation2 + $0x8] sm:$0xff] 0.0
          %290 = vst [vmem:[#allocation2 + $0x10] sm:$0xff] 0.0
          %291 = vst [vmem:[#allocation2 + $0x18] sm:$0xff] 0.0
          %292 = vst [vmem:[#allocation2 + $0x20] sm:$0xff] 0.0
          %293 = vst [vmem:[#allocation2 + $0x28] sm:$0xff] 0.0
          %294 = vst [vmem:[#allocation2 + $0x30] sm:$0xff] 0.0
          %295 = vst [vmem:[#allocation2 + $0x38] sm:$0xff] 0.0
          %296 = vst [vmem:[#allocation2 + $0x40] sm:$0xff] 0.0
          %297 = vst [vmem:[#allocation2 + $0x48] sm:$0xff] 0.0
          %298 = vst [vmem:[#allocation2 + $0x50] sm:$0xff] 0.0
          %299 = vst [vmem:[#allocation2 + $0x58] sm:$0xff] 0.0
          %300 = vst [vmem:[#allocation2 + $0x60] sm:$0xff] 0.0
          %301 = vst [vmem:[#allocation2 + $0x68] sm:$0xff] 0.0
          %302 = vst [vmem:[#allocation2 + $0x70] sm:$0xff] 0.0
          %303 = vst [vmem:[#allocation2 + $0x78] sm:$0xff] 0.0
          %304 = vst [vmem:[#allocation2 + $0x80] sm:$0xff] 0.0
          %305 = vst [vmem:[#allocation2 + $0x88] sm:$0xff] 0.0
          %306 = vst [vmem:[#allocation2 + $0x90] sm:$0xff] 0.0
          %307 = vst [vmem:[#allocation2 + $0x98] sm:$0xff] 0.0
          %308 = vst [vmem:[#allocation2 + $0xa0] sm:$0xff] 0.0
          %309 = vst [vmem:[#allocation2 + $0xa8] sm:$0xff] 0.0
          %310 = vst [vmem:[#allocation2 + $0xb0] sm:$0xff] 0.0
          %311 = vst [vmem:[#allocation2 + $0xb8] sm:$0xff] 0.0
          %312 = vst [vmem:[#allocation2 + $0xc0] sm:$0xff] 0.0
          %313 = vst [vmem:[#allocation2 + $0xc8] sm:$0xff] 0.0
          %314 = vst [vmem:[#allocation2 + $0xd0] sm:$0xff] 0.0
          %315 = vst [vmem:[#allocation2 + $0xd8] sm:$0xff] 0.0
          %316 = vst [vmem:[#allocation2 + $0xe0] sm:$0xff] 0.0
          %317 = vst [vmem:[#allocation2 + $0xe8] sm:$0xff] 0.0
          %318 = vst [vmem:[#allocation2 + $0xf0] sm:$0xff] 0.0
          %319 = vst [vmem:[#allocation2 + $0xf8] sm:$0xff] 0.0
          %320 = vst [vmem:[#allocation2 + $0x100] sm:$0xff] 0.0
          %321 = vst [vmem:[#allocation2 + $0x108] sm:$0xff] 0.0
          %322 = vst [vmem:[#allocation2 + $0x110] sm:$0xff] 0.0
          %323 = vst [vmem:[#allocation2 + $0x118] sm:$0xff] 0.0
          %324 = vst [vmem:[#allocation2 + $0x120] sm:$0xff] 0.0
          %325 = vst [vmem:[#allocation2 + $0x128] sm:$0xff] 0.0
          %326 = vst [vmem:[#allocation2 + $0x130] sm:$0xff] 0.0
          %327 = vst [vmem:[#allocation2 + $0x138] sm:$0xff] 0.0
          %328 = vst [vmem:[#allocation2 + $0x140] sm:$0xff] 0.0
          %329 = vst [vmem:[#allocation2 + $0x148] sm:$0xff] 0.0
          %330 = vst [vmem:[#allocation2 + $0x150] sm:$0xff] 0.0
          %331 = vst [vmem:[#allocation2 + $0x158] sm:$0xff] 0.0
          %332 = vst [vmem:[#allocation2 + $0x160] sm:$0xff] 0.0
          %333 = vst [vmem:[#allocation2 + $0x168] sm:$0xff] 0.0
          %334 = vst [vmem:[#allocation2 + $0x170] sm:$0xff] 0.0
          %335 = vst [vmem:[#allocation2 + $0x178] sm:$0xff] 0.0
          %336 = vst [vmem:[#allocation2 + $0x180] sm:$0xff] 0.0
          %337 = vst [vmem:[#allocation2 + $0x188] sm:$0xff] 0.0
          %338 = vst [vmem:[#allocation2 + $0x190] sm:$0xff] 0.0
          %339 = vst [vmem:[#allocation2 + $0x198] sm:$0xff] 0.0
          %340 = vst [vmem:[#allocation2 + $0x1a0] sm:$0xff] 0.0
          %341 = vst [vmem:[#allocation2 + $0x1a8] sm:$0xff] 0.0
          %342 = vst [vmem:[#allocation2 + $0x1b0] sm:$0xff] 0.0
          %343 = vst [vmem:[#allocation2 + $0x1b8] sm:$0xff] 0.0
          %344 = vst [vmem:[#allocation2 + $0x1c0] sm:$0xff] 0.0
          %345 = vst [vmem:[#allocation2 + $0x1c8] sm:$0xff] 0.0
          %346 = vst [vmem:[#allocation2 + $0x1d0] sm:$0xff] 0.0
          %347 = vst [vmem:[#allocation2 + $0x1d8] sm:$0xff] 0.0
          %348 = vst [vmem:[#allocation2 + $0x1e0] sm:$0xff] 0.0
          %349 = vst [vmem:[#allocation2 + $0x1e8] sm:$0xff] 0.0
          %350 = vst [vmem:[#allocation2 + $0x1f0] sm:$0xff] 0.0
          %351 = vst [vmem:[#allocation2 + $0x1f8] sm:$0xff] 0.0
        $region48: #{ffn_forward.1} parent=31 // pred_fallthru
          _
        %v352 = vld [vmem:[%s229] sm:$0xff]
        %v353 = vld [vmem:[%s229 + $0x8] sm:$0xff]
        %v354 = vld [vmem:[%s229 + $0x10] sm:$0xff]
        %v355 = vld [vmem:[%s229 + $0x18] sm:$0xff]
        %v356 = vld [vmem:[%s229 + $0x20] sm:$0xff]
        %v357 = vld [vmem:[%s229 + $0x28] sm:$0xff]
        %v358 = vld [vmem:[%s229 + $0x30] sm:$0xff]
        %v359 = vld [vmem:[%s229 + $0x38] sm:$0xff]
        %v360 = vld [vmem:[%s229 + $0x40] sm:$0xff]
        %v361 = vld [vmem:[%s229 + $0x48] sm:$0xff]
        %v362 = vld [vmem:[%s229 + $0x50] sm:$0xff]
        %v363 = vld [vmem:[%s229 + $0x58] sm:$0xff]
        %v364 = vld [vmem:[%s229 + $0x60] sm:$0xff]
        %v365 = vld [vmem:[%s229 + $0x68] sm:$0xff]
        %v366 = vld [vmem:[%s229 + $0x70] sm:$0xff]
        %v367 = vld [vmem:[%s229 + $0x78] sm:$0xff]
        %v368 = vld [vmem:[%s229 + $0x80] sm:$0xff]
        %v369 = vld [vmem:[%s229 + $0x88] sm:$0xff]
        %v370 = vld [vmem:[%s229 + $0x90] sm:$0xff]
        %v371 = vld [vmem:[%s229 + $0x98] sm:$0xff]
        %v372 = vld [vmem:[%s229 + $0xa0] sm:$0xff]
        %v373 = vld [vmem:[%s229 + $0xa8] sm:$0xff]
        %v374 = vld [vmem:[%s229 + $0xb0] sm:$0xff]
        %v375 = vld [vmem:[%s229 + $0xb8] sm:$0xff]
        %v376 = vld [vmem:[%s229 + $0xc0] sm:$0xff]
        %v377 = vld [vmem:[%s229 + $0xc8] sm:$0xff]
        %v378 = vld [vmem:[%s229 + $0xd0] sm:$0xff]
        %v379 = vld [vmem:[%s229 + $0xd8] sm:$0xff]
        %v380 = vld [vmem:[%s229 + $0xe0] sm:$0xff]
        %v381 = vld [vmem:[%s229 + $0xe8] sm:$0xff]
        %v382 = vld [vmem:[%s229 + $0xf0] sm:$0xff]
        %v383 = vld [vmem:[%s229 + $0xf8] sm:$0xff]
        %v384 = vld [vmem:[%s238] sm:$0xff]
        %v385 = vld [vmem:[%s238 + $0x8] sm:$0xff]
        %v386 = vld [vmem:[%s238 + $0x10] sm:$0xff]
        %v387 = vld [vmem:[%s238 + $0x18] sm:$0xff]
        %v388 = vld [vmem:[%s238 + $0x20] sm:$0xff]
        %v389 = vld [vmem:[%s238 + $0x28] sm:$0xff]
        %v390 = vld [vmem:[%s238 + $0x30] sm:$0xff]
        %v391 = vld [vmem:[%s238 + $0x38] sm:$0xff]
        %v392 = vld [vmem:[%s238 + $0x40] sm:$0xff]
        %v393 = vld [vmem:[%s238 + $0x48] sm:$0xff]
        %v394 = vld [vmem:[%s238 + $0x50] sm:$0xff]
        %v395 = vld [vmem:[%s238 + $0x58] sm:$0xff]
        %v396 = vld [vmem:[%s238 + $0x60] sm:$0xff]
        %v397 = vld [vmem:[%s238 + $0x68] sm:$0xff]
        %v398 = vld [vmem:[%s238 + $0x70] sm:$0xff]
        %v399 = vld [vmem:[%s238 + $0x78] sm:$0xff]
        %v400 = vld [vmem:[%s238 + $0x80] sm:$0xff]
        %v401 = vld [vmem:[%s238 + $0x88] sm:$0xff]
        %v402 = vld [vmem:[%s238 + $0x90] sm:$0xff]
        %v403 = vld [vmem:[%s238 + $0x98] sm:$0xff]
        %v404 = vld [vmem:[%s238 + $0xa0] sm:$0xff]
        %v405 = vld [vmem:[%s238 + $0xa8] sm:$0xff]
        %v406 = vld [vmem:[%s238 + $0xb0] sm:$0xff]
        %v407 = vld [vmem:[%s238 + $0xb8] sm:$0xff]
        %v408 = vld [vmem:[%s238 + $0xc0] sm:$0xff]
        %v409 = vld [vmem:[%s238 + $0xc8] sm:$0xff]
        %v410 = vld [vmem:[%s238 + $0xd0] sm:$0xff]
        %v411 = vld [vmem:[%s238 + $0xd8] sm:$0xff]
        %v412 = vld [vmem:[%s238 + $0xe0] sm:$0xff]
        %v413 = vld [vmem:[%s238 + $0xe8] sm:$0xff]
        %v414 = vld [vmem:[%s238 + $0xf0] sm:$0xff]
        %v415 = vld [vmem:[%s238 + $0xf8] sm:$0xff]
        %v416 = vld [vmem:[%s238 + $0x100] sm:$0xff]
        %v417 = vld [vmem:[%s238 + $0x108] sm:$0xff]
        %v418 = vld [vmem:[%s238 + $0x110] sm:$0xff]
        %v419 = vld [vmem:[%s238 + $0x118] sm:$0xff]
        %v420 = vld [vmem:[%s238 + $0x120] sm:$0xff]
        %v421 = vld [vmem:[%s238 + $0x128] sm:$0xff]
        %v422 = vld [vmem:[%s238 + $0x130] sm:$0xff]
        %v423 = vld [vmem:[%s238 + $0x138] sm:$0xff]
        %v424 = vld [vmem:[%s238 + $0x140] sm:$0xff]
        %v425 = vld [vmem:[%s238 + $0x148] sm:$0xff]
        %v426 = vld [vmem:[%s238 + $0x150] sm:$0xff]
        %v427 = vld [vmem:[%s238 + $0x158] sm:$0xff]
        %v428 = vld [vmem:[%s238 + $0x160] sm:$0xff]
        %v429 = vld [vmem:[%s238 + $0x168] sm:$0xff]
        %v430 = vld [vmem:[%s238 + $0x170] sm:$0xff]
        %v431 = vld [vmem:[%s238 + $0x178] sm:$0xff]
        %v432 = vld [vmem:[%s238 + $0x180] sm:$0xff]
        %v433 = vld [vmem:[%s238 + $0x188] sm:$0xff]
        %v434 = vld [vmem:[%s238 + $0x190] sm:$0xff]
        %v435 = vld [vmem:[%s238 + $0x198] sm:$0xff]
        %v436 = vld [vmem:[%s238 + $0x1a0] sm:$0xff]
        %v437 = vld [vmem:[%s238 + $0x1a8] sm:$0xff]
        %v438 = vld [vmem:[%s238 + $0x1b0] sm:$0xff]
        %v439 = vld [vmem:[%s238 + $0x1b8] sm:$0xff]
        %v440 = vld [vmem:[%s238 + $0x1c0] sm:$0xff]
        %v441 = vld [vmem:[%s238 + $0x1c8] sm:$0xff]
        %v442 = vld [vmem:[%s238 + $0x1d0] sm:$0xff]
        %v443 = vld [vmem:[%s238 + $0x1d8] sm:$0xff]
        %v444 = vld [vmem:[%s238 + $0x1e0] sm:$0xff]
        %v445 = vld [vmem:[%s238 + $0x1e8] sm:$0xff]
        %v446 = vld [vmem:[%s238 + $0x1f0] sm:$0xff]
        %v447 = vld [vmem:[%s238 + $0x1f8] sm:$0xff]
        %v480 = vunpack.c.l.b16 %v352
        %v481 = vunpack.c.h.b16 %v352
        %v482 = vunpack.c.l.b16 %v353
        %v483 = vunpack.c.h.b16 %v353
        %v484 = vunpack.c.l.b16 %v354
        %v485 = vunpack.c.h.b16 %v354
        %v486 = vunpack.c.l.b16 %v355
        %v487 = vunpack.c.h.b16 %v355
        %v488 = vunpack.c.l.b16 %v356
        %v489 = vunpack.c.h.b16 %v356
        %v490 = vunpack.c.l.b16 %v357
        %v491 = vunpack.c.h.b16 %v357
        %v492 = vunpack.c.l.b16 %v358
        %v493 = vunpack.c.h.b16 %v358
        %v494 = vunpack.c.l.b16 %v359
        %v495 = vunpack.c.h.b16 %v359
        %v496 = vunpack.c.l.b16 %v360
        %v497 = vunpack.c.h.b16 %v360
        %v498 = vunpack.c.l.b16 %v361
        %v499 = vunpack.c.h.b16 %v361
        %v500 = vunpack.c.l.b16 %v362
        %v501 = vunpack.c.h.b16 %v362
        %v502 = vunpack.c.l.b16 %v363
        %v503 = vunpack.c.h.b16 %v363
        %v504 = vunpack.c.l.b16 %v364
        %v505 = vunpack.c.h.b16 %v364
        %v506 = vunpack.c.l.b16 %v365
        %v507 = vunpack.c.h.b16 %v365
        %v508 = vunpack.c.l.b16 %v366
        %v509 = vunpack.c.h.b16 %v366
        %v510 = vunpack.c.l.b16 %v367
        %v511 = vunpack.c.h.b16 %v367
        %v512 = vunpack.c.l.b16 %v368
        %v513 = vunpack.c.h.b16 %v368
        %v514 = vunpack.c.l.b16 %v369
        %v515 = vunpack.c.h.b16 %v369
        %v516 = vunpack.c.l.b16 %v370
        %v517 = vunpack.c.h.b16 %v370
        %v518 = vunpack.c.l.b16 %v371
        %v519 = vunpack.c.h.b16 %v371
        %v520 = vunpack.c.l.b16 %v372
        %v521 = vunpack.c.h.b16 %v372
        %v522 = vunpack.c.l.b16 %v373
        %v523 = vunpack.c.h.b16 %v373
        %v524 = vunpack.c.l.b16 %v374
        %v525 = vunpack.c.h.b16 %v374
        %v526 = vunpack.c.l.b16 %v375
        %v527 = vunpack.c.h.b16 %v375
        %v528 = vunpack.c.l.b16 %v376
        %v529 = vunpack.c.h.b16 %v376
        %v530 = vunpack.c.l.b16 %v377
        %v531 = vunpack.c.h.b16 %v377
        %v532 = vunpack.c.l.b16 %v378
        %v533 = vunpack.c.h.b16 %v378
        %v534 = vunpack.c.l.b16 %v379
        %v535 = vunpack.c.h.b16 %v379
        %v536 = vunpack.c.l.b16 %v380
        %v537 = vunpack.c.h.b16 %v380
        %v538 = vunpack.c.l.b16 %v381
        %v539 = vunpack.c.h.b16 %v381
        %v540 = vunpack.c.l.b16 %v382
        %v541 = vunpack.c.h.b16 %v382
        %v542 = vunpack.c.l.b16 %v383
        %v543 = vunpack.c.h.b16 %v383
        %v544 = vpack.c.b16 %v482, %v480
        %v545 = vpack.c.b16 %v483, %v481
        %v546 = vpack.c.b16 %v486, %v484
        %v547 = vpack.c.b16 %v487, %v485
        %v548 = vpack.c.b16 %v490, %v488
        %v549 = vpack.c.b16 %v491, %v489
        %v550 = vpack.c.b16 %v494, %v492
        %v551 = vpack.c.b16 %v495, %v493
        %v552 = vpack.c.b16 %v498, %v496
        %v553 = vpack.c.b16 %v499, %v497
        %v554 = vpack.c.b16 %v502, %v500
        %v555 = vpack.c.b16 %v503, %v501
        %v556 = vpack.c.b16 %v506, %v504
        %v557 = vpack.c.b16 %v507, %v505
        %v558 = vpack.c.b16 %v510, %v508
        %v559 = vpack.c.b16 %v511, %v509
        %v560 = vpack.c.b16 %v514, %v512
        %v561 = vpack.c.b16 %v515, %v513
        %v562 = vpack.c.b16 %v518, %v516
        %v563 = vpack.c.b16 %v519, %v517
        %v564 = vpack.c.b16 %v522, %v520
        %v565 = vpack.c.b16 %v523, %v521
        %v566 = vpack.c.b16 %v526, %v524
        %v567 = vpack.c.b16 %v527, %v525
        %v568 = vpack.c.b16 %v530, %v528
        %v569 = vpack.c.b16 %v531, %v529
        %v570 = vpack.c.b16 %v534, %v532
        %v571 = vpack.c.b16 %v535, %v533
        %v572 = vpack.c.b16 %v538, %v536
        %v573 = vpack.c.b16 %v539, %v537
        %v574 = vpack.c.b16 %v542, %v540
        %v575 = vpack.c.b16 %v543, %v541
        %v672 = vunpack.c.l.b16 %v384
        %v673 = vunpack.c.h.b16 %v384
        %v674 = vunpack.c.l.b16 %v385
        %v675 = vunpack.c.h.b16 %v385
        %v676 = vunpack.c.l.b16 %v386
        %v677 = vunpack.c.h.b16 %v386
        %v678 = vunpack.c.l.b16 %v387
        %v679 = vunpack.c.h.b16 %v387
        %v680 = vunpack.c.l.b16 %v388
        %v681 = vunpack.c.h.b16 %v388
        %v682 = vunpack.c.l.b16 %v389
        %v683 = vunpack.c.h.b16 %v389
        %v684 = vunpack.c.l.b16 %v390
        %v685 = vunpack.c.h.b16 %v390
        %v686 = vunpack.c.l.b16 %v391
        %v687 = vunpack.c.h.b16 %v391
        %v688 = vunpack.c.l.b16 %v392
        %v689 = vunpack.c.h.b16 %v392
        %v690 = vunpack.c.l.b16 %v393
        %v691 = vunpack.c.h.b16 %v393
        %v692 = vunpack.c.l.b16 %v394
        %v693 = vunpack.c.h.b16 %v394
        %v694 = vunpack.c.l.b16 %v395
        %v695 = vunpack.c.h.b16 %v395
        %v696 = vunpack.c.l.b16 %v396
        %v697 = vunpack.c.h.b16 %v396
        %v698 = vunpack.c.l.b16 %v397
        %v699 = vunpack.c.h.b16 %v397
        %v700 = vunpack.c.l.b16 %v398
        %v701 = vunpack.c.h.b16 %v398
        %v702 = vunpack.c.l.b16 %v399
        %v703 = vunpack.c.h.b16 %v399
        %v704 = vunpack.c.l.b16 %v400
        %v705 = vunpack.c.h.b16 %v400
        %v706 = vunpack.c.l.b16 %v401
        %v707 = vunpack.c.h.b16 %v401
        %v708 = vunpack.c.l.b16 %v402
        %v709 = vunpack.c.h.b16 %v402
        %v710 = vunpack.c.l.b16 %v403
        %v711 = vunpack.c.h.b16 %v403
        %v712 = vunpack.c.l.b16 %v404
        %v713 = vunpack.c.h.b16 %v404
        %v714 = vunpack.c.l.b16 %v405
        %v715 = vunpack.c.h.b16 %v405
        %v716 = vunpack.c.l.b16 %v406
        %v717 = vunpack.c.h.b16 %v406
        %v718 = vunpack.c.l.b16 %v407
        %v719 = vunpack.c.h.b16 %v407
        %v720 = vunpack.c.l.b16 %v408
        %v721 = vunpack.c.h.b16 %v408
        %v722 = vunpack.c.l.b16 %v409
        %v723 = vunpack.c.h.b16 %v409
        %v724 = vunpack.c.l.b16 %v410
        %v725 = vunpack.c.h.b16 %v410
        %v726 = vunpack.c.l.b16 %v411
        %v727 = vunpack.c.h.b16 %v411
        %v728 = vunpack.c.l.b16 %v412
        %v729 = vunpack.c.h.b16 %v412
        %v730 = vunpack.c.l.b16 %v413
        %v731 = vunpack.c.h.b16 %v413
        %v732 = vunpack.c.l.b16 %v414
        %v733 = vunpack.c.h.b16 %v414
        %v734 = vunpack.c.l.b16 %v415
        %v735 = vunpack.c.h.b16 %v415
        %v736 = vunpack.c.l.b16 %v416
        %v737 = vunpack.c.h.b16 %v416
        %v738 = vunpack.c.l.b16 %v417
        %v739 = vunpack.c.h.b16 %v417
        %v740 = vunpack.c.l.b16 %v418
        %v741 = vunpack.c.h.b16 %v418
        %v742 = vunpack.c.l.b16 %v419
        %v743 = vunpack.c.h.b16 %v419
        %v744 = vunpack.c.l.b16 %v420
        %v745 = vunpack.c.h.b16 %v420
        %v746 = vunpack.c.l.b16 %v421
        %v747 = vunpack.c.h.b16 %v421
        %v748 = vunpack.c.l.b16 %v422
        %v749 = vunpack.c.h.b16 %v422
        %v750 = vunpack.c.l.b16 %v423
        %v751 = vunpack.c.h.b16 %v423
        %v752 = vunpack.c.l.b16 %v424
        %v753 = vunpack.c.h.b16 %v424
        %v754 = vunpack.c.l.b16 %v425
        %v755 = vunpack.c.h.b16 %v425
        %v756 = vunpack.c.l.b16 %v426
        %v757 = vunpack.c.h.b16 %v426
        %v758 = vunpack.c.l.b16 %v427
        %v759 = vunpack.c.h.b16 %v427
        %v760 = vunpack.c.l.b16 %v428
        %v761 = vunpack.c.h.b16 %v428
        %v762 = vunpack.c.l.b16 %v429
        %v763 = vunpack.c.h.b16 %v429
        %v764 = vunpack.c.l.b16 %v430
        %v765 = vunpack.c.h.b16 %v430
        %v766 = vunpack.c.l.b16 %v431
        %v767 = vunpack.c.h.b16 %v431
        %v768 = vunpack.c.l.b16 %v432
        %v769 = vunpack.c.h.b16 %v432
        %v770 = vunpack.c.l.b16 %v433
        %v771 = vunpack.c.h.b16 %v433
        %v772 = vunpack.c.l.b16 %v434
        %v773 = vunpack.c.h.b16 %v434
        %v774 = vunpack.c.l.b16 %v435
        %v775 = vunpack.c.h.b16 %v435
        %v776 = vunpack.c.l.b16 %v436
        %v777 = vunpack.c.h.b16 %v436
        %v778 = vunpack.c.l.b16 %v437
        %v779 = vunpack.c.h.b16 %v437
        %v780 = vunpack.c.l.b16 %v438
        %v781 = vunpack.c.h.b16 %v438
        %v782 = vunpack.c.l.b16 %v439
        %v783 = vunpack.c.h.b16 %v439
        %v784 = vunpack.c.l.b16 %v440
        %v785 = vunpack.c.h.b16 %v440
        %v786 = vunpack.c.l.b16 %v441
        %v787 = vunpack.c.h.b16 %v441
        %v788 = vunpack.c.l.b16 %v442
        %v789 = vunpack.c.h.b16 %v442
        %v790 = vunpack.c.l.b16 %v443
        %v791 = vunpack.c.h.b16 %v443
        %v792 = vunpack.c.l.b16 %v444
        %v793 = vunpack.c.h.b16 %v444
        %v794 = vunpack.c.l.b16 %v445
        %v795 = vunpack.c.h.b16 %v445
        %v796 = vunpack.c.l.b16 %v446
        %v797 = vunpack.c.h.b16 %v446
        %v798 = vunpack.c.l.b16 %v447
        %v799 = vunpack.c.h.b16 %v447
        %v800 = vpack.c.b16 %v676, %v672
        %v801 = vpack.c.b16 %v677, %v673
        %v802 = vpack.c.b16 %v678, %v674
        %v803 = vpack.c.b16 %v679, %v675
        %v804 = vpack.c.b16 %v684, %v680
        %v805 = vpack.c.b16 %v685, %v681
        %v806 = vpack.c.b16 %v686, %v682
        %v807 = vpack.c.b16 %v687, %v683
        %v808 = vpack.c.b16 %v692, %v688
        %v809 = vpack.c.b16 %v693, %v689
        %v810 = vpack.c.b16 %v694, %v690
        %v811 = vpack.c.b16 %v695, %v691
        %v812 = vpack.c.b16 %v700, %v696
        %v813 = vpack.c.b16 %v701, %v697
        %v814 = vpack.c.b16 %v702, %v698
        %v815 = vpack.c.b16 %v703, %v699
        %v816 = vpack.c.b16 %v708, %v704
        %v817 = vpack.c.b16 %v709, %v705
        %v818 = vpack.c.b16 %v710, %v706
        %v819 = vpack.c.b16 %v711, %v707
        %v820 = vpack.c.b16 %v716, %v712
        %v821 = vpack.c.b16 %v717, %v713
        %v822 = vpack.c.b16 %v718, %v714
        %v823 = vpack.c.b16 %v719, %v715
        %v824 = vpack.c.b16 %v724, %v720
        %v825 = vpack.c.b16 %v725, %v721
        %v826 = vpack.c.b16 %v726, %v722
        %v827 = vpack.c.b16 %v727, %v723
        %v828 = vpack.c.b16 %v732, %v728
        %v829 = vpack.c.b16 %v733, %v729
        %v830 = vpack.c.b16 %v734, %v730
        %v831 = vpack.c.b16 %v735, %v731
        %v832 = vpack.c.b16 %v740, %v736
        %v833 = vpack.c.b16 %v741, %v737
        %v834 = vpack.c.b16 %v742, %v738
        %v835 = vpack.c.b16 %v743, %v739
        %v836 = vpack.c.b16 %v748, %v744
        %v837 = vpack.c.b16 %v749, %v745
        %v838 = vpack.c.b16 %v750, %v746
        %v839 = vpack.c.b16 %v751, %v747
        %v840 = vpack.c.b16 %v756, %v752
        %v841 = vpack.c.b16 %v757, %v753
        %v842 = vpack.c.b16 %v758, %v754
        %v843 = vpack.c.b16 %v759, %v755
        %v844 = vpack.c.b16 %v764, %v760
        %v845 = vpack.c.b16 %v765, %v761
        %v846 = vpack.c.b16 %v766, %v762
        %v847 = vpack.c.b16 %v767, %v763
        %v848 = vpack.c.b16 %v772, %v768
        %v849 = vpack.c.b16 %v773, %v769
        %v850 = vpack.c.b16 %v774, %v770
        %v851 = vpack.c.b16 %v775, %v771
        %v852 = vpack.c.b16 %v780, %v776
        %v853 = vpack.c.b16 %v781, %v777
        %v854 = vpack.c.b16 %v782, %v778
        %v855 = vpack.c.b16 %v783, %v779
        %v856 = vpack.c.b16 %v788, %v784
        %v857 = vpack.c.b16 %v789, %v785
        %v858 = vpack.c.b16 %v790, %v786
        %v859 = vpack.c.b16 %v791, %v787
        %v860 = vpack.c.b16 %v796, %v792
        %v861 = vpack.c.b16 %v797, %v793
        %v862 = vpack.c.b16 %v798, %v794
        %v863 = vpack.c.b16 %v799, %v795
        %928 = vmatprep.subr.bf16.mxu0 %v801
        %929 = vmatpush1.bf16.msra.mxu0 %v800
        %930 = vmatprep.subr.bf16.mxu0 %v805
        %931 = vmatpush1.bf16.msra.mxu0 %v804
        %932 = vmatprep.subr.bf16.mxu0 %v809
        %933 = vmatpush1.bf16.msra.mxu0 %v808
        %934 = vmatprep.subr.bf16.mxu0 %v813
        %935 = vmatpush1.bf16.msra.mxu0 %v812
        %936 = vmatprep.subr.bf16.mxu0 %v817
        %937 = vmatpush1.bf16.msra.mxu0 %v816
        %938 = vmatprep.subr.bf16.mxu0 %v821
        %939 = vmatpush1.bf16.msra.mxu0 %v820
        %940 = vmatprep.subr.bf16.mxu0 %v825
        %941 = vmatpush1.bf16.msra.mxu0 %v824
        %942 = vmatprep.subr.bf16.mxu0 %v829
        %943 = vmatpush1.bf16.msra.mxu0 %v828
        %944 = vmatprep.subr.bf16.mxu0 %v833
        %945 = vmatpush1.bf16.msra.mxu0 %v832
        %946 = vmatprep.subr.bf16.mxu0 %v837
        %947 = vmatpush1.bf16.msra.mxu0 %v836
        %948 = vmatprep.subr.bf16.mxu0 %v841
        %949 = vmatpush1.bf16.msra.mxu0 %v840
        %950 = vmatprep.subr.bf16.mxu0 %v845
        %951 = vmatpush1.bf16.msra.mxu0 %v844
        %952 = vmatprep.subr.bf16.mxu0 %v849
        %953 = vmatpush1.bf16.msra.mxu0 %v848
        %954 = vmatprep.subr.bf16.mxu0 %v853
        %955 = vmatpush1.bf16.msra.mxu0 %v852
        %956 = vmatprep.subr.bf16.mxu0 %v857
        %957 = vmatpush1.bf16.msra.mxu0 %v856
        %958 = vmatprep.subr.bf16.mxu0 %v861
        %959 = vmatpush1.bf16.msra.mxu0 %v860
        %960 = vmatprep.mubr.bf16.mxu0 %v545
        %961 = vmatmul.mubr.bf16.gmra.mrb[0].mxu0 %v544
        %v962 = vpop.f32.mrb[0].mxu0
        %v963 = vadd.f32 0.0, %v962
        %v964 = vpop.f32.mrb[0].mxu0
        %v965 = vadd.f32 0.0, %v964
        %v966 = vpop.f32.mrb[0].mxu0
        %v967 = vadd.f32 0.0, %v966
        %v968 = vpop.f32.mrb[0].mxu0
        %v969 = vadd.f32 0.0, %v968
        %970 = vmatprep.mubr.bf16.mxu0 %v547
        %971 = vmatmul.mubr.bf16.gmra.mrb[0].mxu0 %v546
        %v972 = vpop.f32.mrb[0].mxu0
        %v973 = vadd.f32 0.0, %v972
        %v974 = vpop.f32.mrb[0].mxu0
        %v975 = vadd.f32 0.0, %v974
        %v976 = vpop.f32.mrb[0].mxu0
        %v977 = vadd.f32 0.0, %v976
        %v978 = vpop.f32.mrb[0].mxu0
        %v979 = vadd.f32 0.0, %v978
        %980 = vmatprep.mubr.bf16.mxu0 %v549
        %981 = vmatmul.mubr.bf16.gmra.mrb[0].mxu0 %v548
        %v982 = vpop.f32.mrb[0].mxu0
        %v983 = vadd.f32 0.0, %v982
        %v984 = vpop.f32.mrb[0].mxu0
        %v985 = vadd.f32 0.0, %v984
        %v986 = vpop.f32.mrb[0].mxu0
        %v987 = vadd.f32 0.0, %v986
        %v988 = vpop.f32.mrb[0].mxu0
        %v989 = vadd.f32 0.0, %v988
        %990 = vmatprep.mubr.bf16.mxu0 %v551
        %991 = vmatmul.mubr.bf16.gmra.mrb[0].mxu0 %v550
        %v992 = vpop.f32.mrb[0].mxu0
        %v993 = vadd.f32 0.0, %v992
        %v994 = vpop.f32.mrb[0].mxu0
        %v995 = vadd.f32 0.0, %v994
        %v996 = vpop.f32.mrb[0].mxu0
        %v997 = vadd.f32 0.0, %v996
        %v998 = vpop.f32.mrb[0].mxu0
        %v999 = vadd.f32 0.0, %v998
        %1000 = vmatprep.mubr.bf16.mxu0 %v553
        %1001 = vmatmul.mubr.bf16.gmra.mrb[0].mxu0 %v552
        %v1002 = vpop.f32.mrb[0].mxu0
        %v1003 = vadd.f32 0.0, %v1002
        %v1004 = vpop.f32.mrb[0].mxu0
        %v1005 = vadd.f32 0.0, %v1004
        %v1006 = vpop.f32.mrb[0].mxu0
        %v1007 = vadd.f32 0.0, %v1006
        %v1008 = vpop.f32.mrb[0].mxu0
        %v1009 = vadd.f32 0.0, %v1008
        %1010 = vmatprep.mubr.bf16.mxu0 %v555
        %1011 = vmatmul.mubr.bf16.gmra.mrb[0].mxu0 %v554
        %v1012 = vpop.f32.mrb[0].mxu0
        %v1013 = vadd.f32 0.0, %v1012
        %v1014 = vpop.f32.mrb[0].mxu0
        %v1015 = vadd.f32 0.0, %v1014
        %v1016 = vpop.f32.mrb[0].mxu0
        %v1017 = vadd.f32 0.0, %v1016
        %v1018 = vpop.f32.mrb[0].mxu0
        %v1019 = vadd.f32 0.0, %v1018
        %1020 = vmatprep.mubr.bf16.mxu0 %v557
        %1021 = vmatmul.mubr.bf16.gmra.mrb[0].mxu0 %v556
        %v1022 = vpop.f32.mrb[0].mxu0
        %v1023 = vadd.f32 0.0, %v1022
        %v1024 = vpop.f32.mrb[0].mxu0
        %v1025 = vadd.f32 0.0, %v1024
        %v1026 = vpop.f32.mrb[0].mxu0
        %v1027 = vadd.f32 0.0, %v1026
        %v1028 = vpop.f32.mrb[0].mxu0
        %v1029 = vadd.f32 0.0, %v1028
        %1030 = vmatprep.mubr.bf16.mxu0 %v559
        %1031 = vmatmul.mubr.bf16.gmra.mrb[0].mxu0 %v558
        %v1032 = vpop.f32.mrb[0].mxu0
        %v1033 = vadd.f32 0.0, %v1032
        %v1034 = vpop.f32.mrb[0].mxu0
        %v1035 = vadd.f32 0.0, %v1034
        %v1036 = vpop.f32.mrb[0].mxu0
        %v1037 = vadd.f32 0.0, %v1036
        %v1038 = vpop.f32.mrb[0].mxu0
        %v1039 = vadd.f32 0.0, %v1038
        %1040 = vmatprep.mubr.bf16.mxu0 %v561
        %1041 = vmatmul.mubr.bf16.gmra.mrb[0].mxu0 %v560
        %v1042 = vpop.f32.mrb[0].mxu0
        %v1043 = vadd.f32 0.0, %v1042
        %v1044 = vpop.f32.mrb[0].mxu0
        %v1045 = vadd.f32 0.0, %v1044
        %v1046 = vpop.f32.mrb[0].mxu0
        %v1047 = vadd.f32 0.0, %v1046
        %v1048 = vpop.f32.mrb[0].mxu0
        %v1049 = vadd.f32 0.0, %v1048
        %1050 = vmatprep.mubr.bf16.mxu0 %v563
        %1051 = vmatmul.mubr.bf16.gmra.mrb[0].mxu0 %v562
        %v1052 = vpop.f32.mrb[0].mxu0
        %v1053 = vadd.f32 0.0, %v1052
        %v1054 = vpop.f32.mrb[0].mxu0
        %v1055 = vadd.f32 0.0, %v1054
        %v1056 = vpop.f32.mrb[0].mxu0
        %v1057 = vadd.f32 0.0, %v1056
        %v1058 = vpop.f32.mrb[0].mxu0
        %v1059 = vadd.f32 0.0, %v1058
        %1060 = vmatprep.mubr.bf16.mxu0 %v565
        %1061 = vmatmul.mubr.bf16.gmra.mrb[0].mxu0 %v564
        %v1062 = vpop.f32.mrb[0].mxu0
        %v1063 = vadd.f32 0.0, %v1062
        %v1064 = vpop.f32.mrb[0].mxu0
        %v1065 = vadd.f32 0.0, %v1064
        %v1066 = vpop.f32.mrb[0].mxu0
        %v1067 = vadd.f32 0.0, %v1066
        %v1068 = vpop.f32.mrb[0].mxu0
        %v1069 = vadd.f32 0.0, %v1068
        %1070 = vmatprep.mubr.bf16.mxu0 %v567
        %1071 = vmatmul.mubr.bf16.gmra.mrb[0].mxu0 %v566
        %v1072 = vpop.f32.mrb[0].mxu0
        %v1073 = vadd.f32 0.0, %v1072
        %v1074 = vpop.f32.mrb[0].mxu0
        %v1075 = vadd.f32 0.0, %v1074
        %v1076 = vpop.f32.mrb[0].mxu0
        %v1077 = vadd.f32 0.0, %v1076
        %v1078 = vpop.f32.mrb[0].mxu0
        %v1079 = vadd.f32 0.0, %v1078
        %1080 = vmatprep.mubr.bf16.mxu0 %v569
        %1081 = vmatmul.mubr.bf16.gmra.mrb[0].mxu0 %v568
        %v1082 = vpop.f32.mrb[0].mxu0
        %v1083 = vadd.f32 0.0, %v1082
        %v1084 = vpop.f32.mrb[0].mxu0
        %v1085 = vadd.f32 0.0, %v1084
        %v1086 = vpop.f32.mrb[0].mxu0
        %v1087 = vadd.f32 0.0, %v1086
        %v1088 = vpop.f32.mrb[0].mxu0
        %v1089 = vadd.f32 0.0, %v1088
        %1090 = vmatprep.mubr.bf16.mxu0 %v571
        %1091 = vmatmul.mubr.bf16.gmra.mrb[0].mxu0 %v570
        %v1092 = vpop.f32.mrb[0].mxu0
        %v1093 = vadd.f32 0.0, %v1092
        %v1094 = vpop.f32.mrb[0].mxu0
        %v1095 = vadd.f32 0.0, %v1094
        %v1096 = vpop.f32.mrb[0].mxu0
        %v1097 = vadd.f32 0.0, %v1096
        %v1098 = vpop.f32.mrb[0].mxu0
        %v1099 = vadd.f32 0.0, %v1098
        %1100 = vmatprep.mubr.bf16.mxu0 %v573
        %1101 = vmatmul.mubr.bf16.gmra.mrb[0].mxu0 %v572
        %v1102 = vpop.f32.mrb[0].mxu0
        %v1103 = vadd.f32 0.0, %v1102
        %v1104 = vpop.f32.mrb[0].mxu0
        %v1105 = vadd.f32 0.0, %v1104
        %v1106 = vpop.f32.mrb[0].mxu0
        %v1107 = vadd.f32 0.0, %v1106
        %v1108 = vpop.f32.mrb[0].mxu0
        %v1109 = vadd.f32 0.0, %v1108
        %1110 = vmatprep.mubr.bf16.mxu0 %v575
        %1111 = vmatmul.mubr.bf16.gmra.mrb[0].mxu0 %v574
        %v1112 = vpop.f32.mrb[0].mxu0
        %v1113 = vadd.f32 0.0, %v1112
        %v1114 = vpop.f32.mrb[0].mxu0
        %v1115 = vadd.f32 0.0, %v1114
        %v1116 = vpop.f32.mrb[0].mxu0
        %v1117 = vadd.f32 0.0, %v1116
        %v1118 = vpop.f32.mrb[0].mxu0
        %v1119 = vadd.f32 0.0, %v1118
        %1120 = vdwg.mxu0
        %1121 = vmatprep.subr.bf16.mxu0 %v803
        %1122 = vmatpush1.bf16.msra.mxu0 %v802
        %1123 = vmatprep.subr.bf16.mxu0 %v807
        %1124 = vmatpush1.bf16.msra.mxu0 %v806
        %1125 = vmatprep.subr.bf16.mxu0 %v811
        %1126 = vmatpush1.bf16.msra.mxu0 %v810
        %1127 = vmatprep.subr.bf16.mxu0 %v815
        %1128 = vmatpush1.bf16.msra.mxu0 %v814
        %1129 = vmatprep.subr.bf16.mxu0 %v819
        %1130 = vmatpush1.bf16.msra.mxu0 %v818
        %1131 = vmatprep.subr.bf16.mxu0 %v823
        %1132 = vmatpush1.bf16.msra.mxu0 %v822
        %1133 = vmatprep.subr.bf16.mxu0 %v827
        %1134 = vmatpush1.bf16.msra.mxu0 %v826
        %1135 = vmatprep.subr.bf16.mxu0 %v831
        %1136 = vmatpush1.bf16.msra.mxu0 %v830
        %1137 = vmatprep.subr.bf16.mxu0 %v835
        %1138 = vmatpush1.bf16.msra.mxu0 %v834
        %1139 = vmatprep.subr.bf16.mxu0 %v839
        %1140 = vmatpush1.bf16.msra.mxu0 %v838
        %1141 = vmatprep.subr.bf16.mxu0 %v843
        %1142 = vmatpush1.bf16.msra.mxu0 %v842
        %1143 = vmatprep.subr.bf16.mxu0 %v847
        %1144 = vmatpush1.bf16.msra.mxu0 %v846
        %1145 = vmatprep.subr.bf16.mxu0 %v851
        %1146 = vmatpush1.bf16.msra.mxu0 %v850
        %1147 = vmatprep.subr.bf16.mxu0 %v855
        %1148 = vmatpush1.bf16.msra.mxu0 %v854
        %1149 = vmatprep.subr.bf16.mxu0 %v859
        %1150 = vmatpush1.bf16.msra.mxu0 %v858
        %1151 = vmatprep.subr.bf16.mxu0 %v863
        %1152 = vmatpush1.bf16.msra.mxu0 %v862
        %1153 = vmatprep.mubr.bf16.mxu0 %v545
        %1154 = vmatmul.mubr.bf16.gmra.mrb[0].mxu0 %v544
        %v1155 = vpop.f32.mrb[0].mxu0
        %v1156 = vadd.f32 0.0, %v1155
        %v1157 = vpop.f32.mrb[0].mxu0
        %v1158 = vadd.f32 0.0, %v1157
        %v1159 = vpop.f32.mrb[0].mxu0
        %v1160 = vadd.f32 0.0, %v1159
        %v1161 = vpop.f32.mrb[0].mxu0
        %v1162 = vadd.f32 0.0, %v1161
        %1163 = vmatprep.mubr.bf16.mxu0 %v547
        %1164 = vmatmul.mubr.bf16.gmra.mrb[0].mxu0 %v546
        %v1165 = vpop.f32.mrb[0].mxu0
        %v1166 = vadd.f32 0.0, %v1165
        %v1167 = vpop.f32.mrb[0].mxu0
        %v1168 = vadd.f32 0.0, %v1167
        %v1169 = vpop.f32.mrb[0].mxu0
        %v1170 = vadd.f32 0.0, %v1169
        %v1171 = vpop.f32.mrb[0].mxu0
        %v1172 = vadd.f32 0.0, %v1171
        %1173 = vmatprep.mubr.bf16.mxu0 %v549
        %1174 = vmatmul.mubr.bf16.gmra.mrb[0].mxu0 %v548
        %v1175 = vpop.f32.mrb[0].mxu0
        %v1176 = vadd.f32 0.0, %v1175
        %v1177 = vpop.f32.mrb[0].mxu0
        %v1178 = vadd.f32 0.0, %v1177
        %v1179 = vpop.f32.mrb[0].mxu0
        %v1180 = vadd.f32 0.0, %v1179
        %v1181 = vpop.f32.mrb[0].mxu0
        %v1182 = vadd.f32 0.0, %v1181
        %1183 = vmatprep.mubr.bf16.mxu0 %v551
        %1184 = vmatmul.mubr.bf16.gmra.mrb[0].mxu0 %v550
        %v1185 = vpop.f32.mrb[0].mxu0
        %v1186 = vadd.f32 0.0, %v1185
        %v1187 = vpop.f32.mrb[0].mxu0
        %v1188 = vadd.f32 0.0, %v1187
        %v1189 = vpop.f32.mrb[0].mxu0
        %v1190 = vadd.f32 0.0, %v1189
        %v1191 = vpop.f32.mrb[0].mxu0
        %v1192 = vadd.f32 0.0, %v1191
        %1193 = vmatprep.mubr.bf16.mxu0 %v553
        %1194 = vmatmul.mubr.bf16.gmra.mrb[0].mxu0 %v552
        %v1195 = vpop.f32.mrb[0].mxu0
        %v1196 = vadd.f32 0.0, %v1195
        %v1197 = vpop.f32.mrb[0].mxu0
        %v1198 = vadd.f32 0.0, %v1197
        %v1199 = vpop.f32.mrb[0].mxu0
        %v1200 = vadd.f32 0.0, %v1199
        %v1201 = vpop.f32.mrb[0].mxu0
        %v1202 = vadd.f32 0.0, %v1201
        %1203 = vmatprep.mubr.bf16.mxu0 %v555
        %1204 = vmatmul.mubr.bf16.gmra.mrb[0].mxu0 %v554
        %v1205 = vpop.f32.mrb[0].mxu0
        %v1206 = vadd.f32 0.0, %v1205
        %v1207 = vpop.f32.mrb[0].mxu0
        %v1208 = vadd.f32 0.0, %v1207
        %v1209 = vpop.f32.mrb[0].mxu0
        %v1210 = vadd.f32 0.0, %v1209
        %v1211 = vpop.f32.mrb[0].mxu0
        %v1212 = vadd.f32 0.0, %v1211
        %1213 = vmatprep.mubr.bf16.mxu0 %v557
        %1214 = vmatmul.mubr.bf16.gmra.mrb[0].mxu0 %v556
        %v1215 = vpop.f32.mrb[0].mxu0
        %v1216 = vadd.f32 0.0, %v1215
        %v1217 = vpop.f32.mrb[0].mxu0
        %v1218 = vadd.f32 0.0, %v1217
        %v1219 = vpop.f32.mrb[0].mxu0
        %v1220 = vadd.f32 0.0, %v1219
        %v1221 = vpop.f32.mrb[0].mxu0
        %v1222 = vadd.f32 0.0, %v1221
        %1223 = vmatprep.mubr.bf16.mxu0 %v559
        %1224 = vmatmul.mubr.bf16.gmra.mrb[0].mxu0 %v558
        %v1225 = vpop.f32.mrb[0].mxu0
        %v1226 = vadd.f32 0.0, %v1225
        %v1227 = vpop.f32.mrb[0].mxu0
        %v1228 = vadd.f32 0.0, %v1227
        %v1229 = vpop.f32.mrb[0].mxu0
        %v1230 = vadd.f32 0.0, %v1229
        %v1231 = vpop.f32.mrb[0].mxu0
        %v1232 = vadd.f32 0.0, %v1231
        %1233 = vmatprep.mubr.bf16.mxu0 %v561
        %1234 = vmatmul.mubr.bf16.gmra.mrb[0].mxu0 %v560
        %v1235 = vpop.f32.mrb[0].mxu0
        %v1236 = vadd.f32 0.0, %v1235
        %v1237 = vpop.f32.mrb[0].mxu0
        %v1238 = vadd.f32 0.0, %v1237
        %v1239 = vpop.f32.mrb[0].mxu0
        %v1240 = vadd.f32 0.0, %v1239
        %v1241 = vpop.f32.mrb[0].mxu0
        %v1242 = vadd.f32 0.0, %v1241
        %1243 = vmatprep.mubr.bf16.mxu0 %v563
        %1244 = vmatmul.mubr.bf16.gmra.mrb[0].mxu0 %v562
        %v1245 = vpop.f32.mrb[0].mxu0
        %v1246 = vadd.f32 0.0, %v1245
        %v1247 = vpop.f32.mrb[0].mxu0
        %v1248 = vadd.f32 0.0, %v1247
        %v1249 = vpop.f32.mrb[0].mxu0
        %v1250 = vadd.f32 0.0, %v1249
        %v1251 = vpop.f32.mrb[0].mxu0
        %v1252 = vadd.f32 0.0, %v1251
        %1253 = vmatprep.mubr.bf16.mxu0 %v565
        %1254 = vmatmul.mubr.bf16.gmra.mrb[0].mxu0 %v564
        %v1255 = vpop.f32.mrb[0].mxu0
        %v1256 = vadd.f32 0.0, %v1255
        %v1257 = vpop.f32.mrb[0].mxu0
        %v1258 = vadd.f32 0.0, %v1257
        %v1259 = vpop.f32.mrb[0].mxu0
        %v1260 = vadd.f32 0.0, %v1259
        %v1261 = vpop.f32.mrb[0].mxu0
        %v1262 = vadd.f32 0.0, %v1261
        %1263 = vmatprep.mubr.bf16.mxu0 %v567
        %1264 = vmatmul.mubr.bf16.gmra.mrb[0].mxu0 %v566
        %v1265 = vpop.f32.mrb[0].mxu0
        %v1266 = vadd.f32 0.0, %v1265
        %v1267 = vpop.f32.mrb[0].mxu0
        %v1268 = vadd.f32 0.0, %v1267
        %v1269 = vpop.f32.mrb[0].mxu0
        %v1270 = vadd.f32 0.0, %v1269
        %v1271 = vpop.f32.mrb[0].mxu0
        %v1272 = vadd.f32 0.0, %v1271
        %1273 = vmatprep.mubr.bf16.mxu0 %v569
        %1274 = vmatmul.mubr.bf16.gmra.mrb[0].mxu0 %v568
        %v1275 = vpop.f32.mrb[0].mxu0
        %v1276 = vadd.f32 0.0, %v1275
        %v1277 = vpop.f32.mrb[0].mxu0
        %v1278 = vadd.f32 0.0, %v1277
        %v1279 = vpop.f32.mrb[0].mxu0
        %v1280 = vadd.f32 0.0, %v1279
        %v1281 = vpop.f32.mrb[0].mxu0
        %v1282 = vadd.f32 0.0, %v1281
        %1283 = vmatprep.mubr.bf16.mxu0 %v571
        %1284 = vmatmul.mubr.bf16.gmra.mrb[0].mxu0 %v570
        %v1285 = vpop.f32.mrb[0].mxu0
        %v1286 = vadd.f32 0.0, %v1285
        %v1287 = vpop.f32.mrb[0].mxu0
        %v1288 = vadd.f32 0.0, %v1287
        %v1289 = vpop.f32.mrb[0].mxu0
        %v1290 = vadd.f32 0.0, %v1289
        %v1291 = vpop.f32.mrb[0].mxu0
        %v1292 = vadd.f32 0.0, %v1291
        %1293 = vmatprep.mubr.bf16.mxu0 %v573
        %1294 = vmatmul.mubr.bf16.gmra.mrb[0].mxu0 %v572
        %v1295 = vpop.f32.mrb[0].mxu0
        %v1296 = vadd.f32 0.0, %v1295
        %v1297 = vpop.f32.mrb[0].mxu0
        %v1298 = vadd.f32 0.0, %v1297
        %v1299 = vpop.f32.mrb[0].mxu0
        %v1300 = vadd.f32 0.0, %v1299
        %v1301 = vpop.f32.mrb[0].mxu0
        %v1302 = vadd.f32 0.0, %v1301
        %1303 = vmatprep.mubr.bf16.mxu0 %v575
        %1304 = vmatmul.mubr.bf16.gmra.mrb[0].mxu0 %v574
        %v1305 = vpop.f32.mrb[0].mxu0
        %v1306 = vadd.f32 0.0, %v1305
        %v1307 = vpop.f32.mrb[0].mxu0
        %v1308 = vadd.f32 0.0, %v1307
        %v1309 = vpop.f32.mrb[0].mxu0
        %v1310 = vadd.f32 0.0, %v1309
        %v1311 = vpop.f32.mrb[0].mxu0
        %v1312 = vadd.f32 0.0, %v1311
        %1313 = vdwg.mxu0
        %v1314 = vmax.f32 %v963, 0.0
        %v1315 = vmax.f32 %v965, 0.0
        %v1316 = vmax.f32 %v1156, 0.0
        %v1317 = vmax.f32 %v1158, 0.0
        %v1318 = vmax.f32 %v967, 0.0
        %v1319 = vmax.f32 %v969, 0.0
        %v1320 = vmax.f32 %v1160, 0.0
        %v1321 = vmax.f32 %v1162, 0.0
        %v1322 = vmax.f32 %v973, 0.0
        %v1323 = vmax.f32 %v975, 0.0
        %v1324 = vmax.f32 %v1166, 0.0
        %v1325 = vmax.f32 %v1168, 0.0
        %v1326 = vmax.f32 %v977, 0.0
        %v1327 = vmax.f32 %v979, 0.0
        %v1328 = vmax.f32 %v1170, 0.0
        %v1329 = vmax.f32 %v1172, 0.0
        %v1330 = vmax.f32 %v983, 0.0
        %v1331 = vmax.f32 %v985, 0.0
        %v1332 = vmax.f32 %v1176, 0.0
        %v1333 = vmax.f32 %v1178, 0.0
        %v1334 = vmax.f32 %v987, 0.0
        %v1335 = vmax.f32 %v989, 0.0
        %v1336 = vmax.f32 %v1180, 0.0
        %v1337 = vmax.f32 %v1182, 0.0
        %v1338 = vmax.f32 %v993, 0.0
        %v1339 = vmax.f32 %v995, 0.0
        %v1340 = vmax.f32 %v1186, 0.0
        %v1341 = vmax.f32 %v1188, 0.0
        %v1342 = vmax.f32 %v997, 0.0
        %v1343 = vmax.f32 %v999, 0.0
        %v1344 = vmax.f32 %v1190, 0.0
        %v1345 = vmax.f32 %v1192, 0.0
        %v1346 = vmax.f32 %v1003, 0.0
        %v1347 = vmax.f32 %v1005, 0.0
        %v1348 = vmax.f32 %v1196, 0.0
        %v1349 = vmax.f32 %v1198, 0.0
        %v1350 = vmax.f32 %v1007, 0.0
        %v1351 = vmax.f32 %v1009, 0.0
        %v1352 = vmax.f32 %v1200, 0.0
        %v1353 = vmax.f32 %v1202, 0.0
        %v1354 = vmax.f32 %v1013, 0.0
        %v1355 = vmax.f32 %v1015, 0.0
        %v1356 = vmax.f32 %v1206, 0.0
        %v1357 = vmax.f32 %v1208, 0.0
        %v1358 = vmax.f32 %v1017, 0.0
        %v1359 = vmax.f32 %v1019, 0.0
        %v1360 = vmax.f32 %v1210, 0.0
        %v1361 = vmax.f32 %v1212, 0.0
        %v1362 = vmax.f32 %v1023, 0.0
        %v1363 = vmax.f32 %v1025, 0.0
        %v1364 = vmax.f32 %v1216, 0.0
        %v1365 = vmax.f32 %v1218, 0.0
        %v1366 = vmax.f32 %v1027, 0.0
        %v1367 = vmax.f32 %v1029, 0.0
        %v1368 = vmax.f32 %v1220, 0.0
        %v1369 = vmax.f32 %v1222, 0.0
        %v1370 = vmax.f32 %v1033, 0.0
        %v1371 = vmax.f32 %v1035, 0.0
        %v1372 = vmax.f32 %v1226, 0.0
        %v1373 = vmax.f32 %v1228, 0.0
        %v1374 = vmax.f32 %v1037, 0.0
        %v1375 = vmax.f32 %v1039, 0.0
        %v1376 = vmax.f32 %v1230, 0.0
        %v1377 = vmax.f32 %v1232, 0.0
        %v1378 = vmax.f32 %v1043, 0.0
        %v1379 = vmax.f32 %v1045, 0.0
        %v1380 = vmax.f32 %v1236, 0.0
        %v1381 = vmax.f32 %v1238, 0.0
        %v1382 = vmax.f32 %v1047, 0.0
        %v1383 = vmax.f32 %v1049, 0.0
        %v1384 = vmax.f32 %v1240, 0.0
        %v1385 = vmax.f32 %v1242, 0.0
        %v1386 = vmax.f32 %v1053, 0.0
        %v1387 = vmax.f32 %v1055, 0.0
        %v1388 = vmax.f32 %v1246, 0.0
        %v1389 = vmax.f32 %v1248, 0.0
        %v1390 = vmax.f32 %v1057, 0.0
        %v1391 = vmax.f32 %v1059, 0.0
        %v1392 = vmax.f32 %v1250, 0.0
        %v1393 = vmax.f32 %v1252, 0.0
        %v1394 = vmax.f32 %v1063, 0.0
        %v1395 = vmax.f32 %v1065, 0.0
        %v1396 = vmax.f32 %v1256, 0.0
        %v1397 = vmax.f32 %v1258, 0.0
        %v1398 = vmax.f32 %v1067, 0.0
        %v1399 = vmax.f32 %v1069, 0.0
        %v1400 = vmax.f32 %v1260, 0.0
        %v1401 = vmax.f32 %v1262, 0.0
        %v1402 = vmax.f32 %v1073, 0.0
        %v1403 = vmax.f32 %v1075, 0.0
        %v1404 = vmax.f32 %v1266, 0.0
        %v1405 = vmax.f32 %v1268, 0.0
        %v1406 = vmax.f32 %v1077, 0.0
        %v1407 = vmax.f32 %v1079, 0.0
        %v1408 = vmax.f32 %v1270, 0.0
        %v1409 = vmax.f32 %v1272, 0.0
        %v1410 = vmax.f32 %v1083, 0.0
        %v1411 = vmax.f32 %v1085, 0.0
        %v1412 = vmax.f32 %v1276, 0.0
        %v1413 = vmax.f32 %v1278, 0.0
        %v1414 = vmax.f32 %v1087, 0.0
        %v1415 = vmax.f32 %v1089, 0.0
        %v1416 = vmax.f32 %v1280, 0.0
        %v1417 = vmax.f32 %v1282, 0.0
        %v1418 = vmax.f32 %v1093, 0.0
        %v1419 = vmax.f32 %v1095, 0.0
        %v1420 = vmax.f32 %v1286, 0.0
        %v1421 = vmax.f32 %v1288, 0.0
        %v1422 = vmax.f32 %v1097, 0.0
        %v1423 = vmax.f32 %v1099, 0.0
        %v1424 = vmax.f32 %v1290, 0.0
        %v1425 = vmax.f32 %v1292, 0.0
        %v1426 = vmax.f32 %v1103, 0.0
        %v1427 = vmax.f32 %v1105, 0.0
        %v1428 = vmax.f32 %v1296, 0.0
        %v1429 = vmax.f32 %v1298, 0.0
        %v1430 = vmax.f32 %v1107, 0.0
        %v1431 = vmax.f32 %v1109, 0.0
        %v1432 = vmax.f32 %v1300, 0.0
        %v1433 = vmax.f32 %v1302, 0.0
        %v1434 = vmax.f32 %v1113, 0.0
        %v1435 = vmax.f32 %v1115, 0.0
        %v1436 = vmax.f32 %v1306, 0.0
        %v1437 = vmax.f32 %v1308, 0.0
        %v1438 = vmax.f32 %v1117, 0.0
        %v1439 = vmax.f32 %v1119, 0.0
        %v1440 = vmax.f32 %v1310, 0.0
        %v1441 = vmax.f32 %v1312, 0.0
        %v1442 = vmul.f32 %v1314, %v1314
        %v1443 = vmul.f32 %v1315, %v1315
        %v1444 = vmul.f32 %v1316, %v1316
        %v1445 = vmul.f32 %v1317, %v1317
        %v1446 = vmul.f32 %v1318, %v1318
        %v1447 = vmul.f32 %v1319, %v1319
        %v1448 = vmul.f32 %v1320, %v1320
        %v1449 = vmul.f32 %v1321, %v1321
        %v1450 = vmul.f32 %v1322, %v1322
        %v1451 = vmul.f32 %v1323, %v1323
        %v1452 = vmul.f32 %v1324, %v1324
        %v1453 = vmul.f32 %v1325, %v1325
        %v1454 = vmul.f32 %v1326, %v1326
        %v1455 = vmul.f32 %v1327, %v1327
        %v1456 = vmul.f32 %v1328, %v1328
        %v1457 = vmul.f32 %v1329, %v1329
        %v1458 = vmul.f32 %v1330, %v1330
        %v1459 = vmul.f32 %v1331, %v1331
        %v1460 = vmul.f32 %v1332, %v1332
        %v1461 = vmul.f32 %v1333, %v1333
        %v1462 = vmul.f32 %v1334, %v1334
        %v1463 = vmul.f32 %v1335, %v1335
        %v1464 = vmul.f32 %v1336, %v1336
        %v1465 = vmul.f32 %v1337, %v1337
        %v1466 = vmul.f32 %v1338, %v1338
        %v1467 = vmul.f32 %v1339, %v1339
        %v1468 = vmul.f32 %v1340, %v1340
        %v1469 = vmul.f32 %v1341, %v1341
        %v1470 = vmul.f32 %v1342, %v1342
        %v1471 = vmul.f32 %v1343, %v1343
        %v1472 = vmul.f32 %v1344, %v1344
        %v1473 = vmul.f32 %v1345, %v1345
        %v1474 = vmul.f32 %v1346, %v1346
        %v1475 = vmul.f32 %v1347, %v1347
        %v1476 = vmul.f32 %v1348, %v1348
        %v1477 = vmul.f32 %v1349, %v1349
        %v1478 = vmul.f32 %v1350, %v1350
        %v1479 = vmul.f32 %v1351, %v1351
        %v1480 = vmul.f32 %v1352, %v1352
        %v1481 = vmul.f32 %v1353, %v1353
        %v1482 = vmul.f32 %v1354, %v1354
        %v1483 = vmul.f32 %v1355, %v1355
        %v1484 = vmul.f32 %v1356, %v1356
        %v1485 = vmul.f32 %v1357, %v1357
        %v1486 = vmul.f32 %v1358, %v1358
        %v1487 = vmul.f32 %v1359, %v1359
        %v1488 = vmul.f32 %v1360, %v1360
        %v1489 = vmul.f32 %v1361, %v1361
        %v1490 = vmul.f32 %v1362, %v1362
        %v1491 = vmul.f32 %v1363, %v1363
        %v1492 = vmul.f32 %v1364, %v1364
        %v1493 = vmul.f32 %v1365, %v1365
        %v1494 = vmul.f32 %v1366, %v1366
        %v1495 = vmul.f32 %v1367, %v1367
        %v1496 = vmul.f32 %v1368, %v1368
        %v1497 = vmul.f32 %v1369, %v1369
        %v1498 = vmul.f32 %v1370, %v1370
        %v1499 = vmul.f32 %v1371, %v1371
        %v1500 = vmul.f32 %v1372, %v1372
        %v1501 = vmul.f32 %v1373, %v1373
        %v1502 = vmul.f32 %v1374, %v1374
        %v1503 = vmul.f32 %v1375, %v1375
        %v1504 = vmul.f32 %v1376, %v1376
        %v1505 = vmul.f32 %v1377, %v1377
        %v1506 = vmul.f32 %v1378, %v1378
        %v1507 = vmul.f32 %v1379, %v1379
        %v1508 = vmul.f32 %v1380, %v1380
        %v1509 = vmul.f32 %v1381, %v1381
        %v1510 = vmul.f32 %v1382, %v1382
        %v1511 = vmul.f32 %v1383, %v1383
        %v1512 = vmul.f32 %v1384, %v1384
        %v1513 = vmul.f32 %v1385, %v1385
        %v1514 = vmul.f32 %v1386, %v1386
        %v1515 = vmul.f32 %v1387, %v1387
        %v1516 = vmul.f32 %v1388, %v1388
        %v1517 = vmul.f32 %v1389, %v1389
        %v1518 = vmul.f32 %v1390, %v1390
        %v1519 = vmul.f32 %v1391, %v1391
        %v1520 = vmul.f32 %v1392, %v1392
        %v1521 = vmul.f32 %v1393, %v1393
        %v1522 = vmul.f32 %v1394, %v1394
        %v1523 = vmul.f32 %v1395, %v1395
        %v1524 = vmul.f32 %v1396, %v1396
        %v1525 = vmul.f32 %v1397, %v1397
        %v1526 = vmul.f32 %v1398, %v1398
        %v1527 = vmul.f32 %v1399, %v1399
        %v1528 = vmul.f32 %v1400, %v1400
        %v1529 = vmul.f32 %v1401, %v1401
        %v1530 = vmul.f32 %v1402, %v1402
        %v1531 = vmul.f32 %v1403, %v1403
        %v1532 = vmul.f32 %v1404, %v1404
        %v1533 = vmul.f32 %v1405, %v1405
        %v1534 = vmul.f32 %v1406, %v1406
        %v1535 = vmul.f32 %v1407, %v1407
        %v1536 = vmul.f32 %v1408, %v1408
        %v1537 = vmul.f32 %v1409, %v1409
        %v1538 = vmul.f32 %v1410, %v1410
        %v1539 = vmul.f32 %v1411, %v1411
        %v1540 = vmul.f32 %v1412, %v1412
        %v1541 = vmul.f32 %v1413, %v1413
        %v1542 = vmul.f32 %v1414, %v1414
        %v1543 = vmul.f32 %v1415, %v1415
        %v1544 = vmul.f32 %v1416, %v1416
        %v1545 = vmul.f32 %v1417, %v1417
        %v1546 = vmul.f32 %v1418, %v1418
        %v1547 = vmul.f32 %v1419, %v1419
        %v1548 = vmul.f32 %v1420, %v1420
        %v1549 = vmul.f32 %v1421, %v1421
        %v1550 = vmul.f32 %v1422, %v1422
        %v1551 = vmul.f32 %v1423, %v1423
        %v1552 = vmul.f32 %v1424, %v1424
        %v1553 = vmul.f32 %v1425, %v1425
        %v1554 = vmul.f32 %v1426, %v1426
        %v1555 = vmul.f32 %v1427, %v1427
        %v1556 = vmul.f32 %v1428, %v1428
        %v1557 = vmul.f32 %v1429, %v1429
        %v1558 = vmul.f32 %v1430, %v1430
        %v1559 = vmul.f32 %v1431, %v1431
        %v1560 = vmul.f32 %v1432, %v1432
        %v1561 = vmul.f32 %v1433, %v1433
        %v1562 = vmul.f32 %v1434, %v1434
        %v1563 = vmul.f32 %v1435, %v1435
        %v1564 = vmul.f32 %v1436, %v1436
        %v1565 = vmul.f32 %v1437, %v1437
        %v1566 = vmul.f32 %v1438, %v1438
        %v1567 = vmul.f32 %v1439, %v1439
        %v1568 = vmul.f32 %v1440, %v1440
        %v1569 = vmul.f32 %v1441, %v1441
        %v1570 = vld [vmem:[#allocation2] sm:$0xff]
        %v1571 = vld [vmem:[#allocation2 + $0x8] sm:$0xff]
        %v1572 = vld [vmem:[#allocation2 + $0x10] sm:$0xff]
        %v1573 = vld [vmem:[#allocation2 + $0x18] sm:$0xff]
        %v1574 = vld [vmem:[#allocation2 + $0x20] sm:$0xff]
        %v1575 = vld [vmem:[#allocation2 + $0x28] sm:$0xff]
        %v1576 = vld [vmem:[#allocation2 + $0x30] sm:$0xff]
        %v1577 = vld [vmem:[#allocation2 + $0x38] sm:$0xff]
        %v1578 = vld [vmem:[#allocation2 + $0x40] sm:$0xff]
        %v1579 = vld [vmem:[#allocation2 + $0x48] sm:$0xff]
        %v1580 = vld [vmem:[#allocation2 + $0x50] sm:$0xff]
        %v1581 = vld [vmem:[#allocation2 + $0x58] sm:$0xff]
        %v1582 = vld [vmem:[#allocation2 + $0x60] sm:$0xff]
        %v1583 = vld [vmem:[#allocation2 + $0x68] sm:$0xff]
        %v1584 = vld [vmem:[#allocation2 + $0x70] sm:$0xff]
        %v1585 = vld [vmem:[#allocation2 + $0x78] sm:$0xff]
        %v1586 = vld [vmem:[#allocation2 + $0x80] sm:$0xff]
        %v1587 = vld [vmem:[#allocation2 + $0x88] sm:$0xff]
        %v1588 = vld [vmem:[#allocation2 + $0x90] sm:$0xff]
        %v1589 = vld [vmem:[#allocation2 + $0x98] sm:$0xff]
        %v1590 = vld [vmem:[#allocation2 + $0xa0] sm:$0xff]
        %v1591 = vld [vmem:[#allocation2 + $0xa8] sm:$0xff]
        %v1592 = vld [vmem:[#allocation2 + $0xb0] sm:$0xff]
        %v1593 = vld [vmem:[#allocation2 + $0xb8] sm:$0xff]
        %v1594 = vld [vmem:[#allocation2 + $0xc0] sm:$0xff]
        %v1595 = vld [vmem:[#allocation2 + $0xc8] sm:$0xff]
        %v1596 = vld [vmem:[#allocation2 + $0xd0] sm:$0xff]
        %v1597 = vld [vmem:[#allocation2 + $0xd8] sm:$0xff]
        %v1598 = vld [vmem:[#allocation2 + $0xe0] sm:$0xff]
        %v1599 = vld [vmem:[#allocation2 + $0xe8] sm:$0xff]
        %v1600 = vld [vmem:[#allocation2 + $0xf0] sm:$0xff]
        %v1601 = vld [vmem:[#allocation2 + $0xf8] sm:$0xff]
        %v1602 = vld [vmem:[#allocation2 + $0x100] sm:$0xff]
        %v1603 = vld [vmem:[#allocation2 + $0x108] sm:$0xff]
        %v1604 = vld [vmem:[#allocation2 + $0x110] sm:$0xff]
        %v1605 = vld [vmem:[#allocation2 + $0x118] sm:$0xff]
        %v1606 = vld [vmem:[#allocation2 + $0x120] sm:$0xff]
        %v1607 = vld [vmem:[#allocation2 + $0x128] sm:$0xff]
        %v1608 = vld [vmem:[#allocation2 + $0x130] sm:$0xff]
        %v1609 = vld [vmem:[#allocation2 + $0x138] sm:$0xff]
        %v1610 = vld [vmem:[#allocation2 + $0x140] sm:$0xff]
        %v1611 = vld [vmem:[#allocation2 + $0x148] sm:$0xff]
        %v1612 = vld [vmem:[#allocation2 + $0x150] sm:$0xff]
        %v1613 = vld [vmem:[#allocation2 + $0x158] sm:$0xff]
        %v1614 = vld [vmem:[#allocation2 + $0x160] sm:$0xff]
        %v1615 = vld [vmem:[#allocation2 + $0x168] sm:$0xff]
        %v1616 = vld [vmem:[#allocation2 + $0x170] sm:$0xff]
        %v1617 = vld [vmem:[#allocation2 + $0x178] sm:$0xff]
        %v1618 = vld [vmem:[#allocation2 + $0x180] sm:$0xff]
        %v1619 = vld [vmem:[#allocation2 + $0x188] sm:$0xff]
        %v1620 = vld [vmem:[#allocation2 + $0x190] sm:$0xff]
        %v1621 = vld [vmem:[#allocation2 + $0x198] sm:$0xff]
        %v1622 = vld [vmem:[#allocation2 + $0x1a0] sm:$0xff]
        %v1623 = vld [vmem:[#allocation2 + $0x1a8] sm:$0xff]
        %v1624 = vld [vmem:[#allocation2 + $0x1b0] sm:$0xff]
        %v1625 = vld [vmem:[#allocation2 + $0x1b8] sm:$0xff]
        %v1626 = vld [vmem:[#allocation2 + $0x1c0] sm:$0xff]
        %v1627 = vld [vmem:[#allocation2 + $0x1c8] sm:$0xff]
        %v1628 = vld [vmem:[#allocation2 + $0x1d0] sm:$0xff]
        %v1629 = vld [vmem:[#allocation2 + $0x1d8] sm:$0xff]
        %v1630 = vld [vmem:[#allocation2 + $0x1e0] sm:$0xff]
        %v1631 = vld [vmem:[#allocation2 + $0x1e8] sm:$0xff]
        %v1632 = vld [vmem:[#allocation2 + $0x1f0] sm:$0xff]
        %v1633 = vld [vmem:[#allocation2 + $0x1f8] sm:$0xff]
        %v1634 = vpack.c.bf16 %v1446, %v1442
        %v1635 = vpack.c.bf16 %v1447, %v1443
        %v1636 = vpack.c.bf16 %v1448, %v1444
        %v1637 = vpack.c.bf16 %v1449, %v1445
        %v1638 = vpack.c.bf16 %v1454, %v1450
        %v1639 = vpack.c.bf16 %v1455, %v1451
        %v1640 = vpack.c.bf16 %v1456, %v1452
        %v1641 = vpack.c.bf16 %v1457, %v1453
        %v1642 = vpack.c.bf16 %v1462, %v1458
        %v1643 = vpack.c.bf16 %v1463, %v1459
        %v1644 = vpack.c.bf16 %v1464, %v1460
        %v1645 = vpack.c.bf16 %v1465, %v1461
        %v1646 = vpack.c.bf16 %v1470, %v1466
        %v1647 = vpack.c.bf16 %v1471, %v1467
        %v1648 = vpack.c.bf16 %v1472, %v1468
        %v1649 = vpack.c.bf16 %v1473, %v1469
        %v1650 = vpack.c.bf16 %v1478, %v1474
        %v1651 = vpack.c.bf16 %v1479, %v1475
        %v1652 = vpack.c.bf16 %v1480, %v1476
        %v1653 = vpack.c.bf16 %v1481, %v1477
        %v1654 = vpack.c.bf16 %v1486, %v1482
        %v1655 = vpack.c.bf16 %v1487, %v1483
        %v1656 = vpack.c.bf16 %v1488, %v1484
        %v1657 = vpack.c.bf16 %v1489, %v1485
        %v1658 = vpack.c.bf16 %v1494, %v1490
        %v1659 = vpack.c.bf16 %v1495, %v1491
        %v1660 = vpack.c.bf16 %v1496, %v1492
        %v1661 = vpack.c.bf16 %v1497, %v1493
        %v1662 = vpack.c.bf16 %v1502, %v1498
        %v1663 = vpack.c.bf16 %v1503, %v1499
        %v1664 = vpack.c.bf16 %v1504, %v1500
        %v1665 = vpack.c.bf16 %v1505, %v1501
        %v1666 = vpack.c.bf16 %v1510, %v1506
        %v1667 = vpack.c.bf16 %v1511, %v1507
        %v1668 = vpack.c.bf16 %v1512, %v1508
        %v1669 = vpack.c.bf16 %v1513, %v1509
        %v1670 = vpack.c.bf16 %v1518, %v1514
        %v1671 = vpack.c.bf16 %v1519, %v1515
        %v1672 = vpack.c.bf16 %v1520, %v1516
        %v1673 = vpack.c.bf16 %v1521, %v1517
        %v1674 = vpack.c.bf16 %v1526, %v1522
        %v1675 = vpack.c.bf16 %v1527, %v1523
        %v1676 = vpack.c.bf16 %v1528, %v1524
        %v1677 = vpack.c.bf16 %v1529, %v1525
        %v1678 = vpack.c.bf16 %v1534, %v1530
        %v1679 = vpack.c.bf16 %v1535, %v1531
        %v1680 = vpack.c.bf16 %v1536, %v1532
        %v1681 = vpack.c.bf16 %v1537, %v1533
        %v1682 = vpack.c.bf16 %v1542, %v1538
        %v1683 = vpack.c.bf16 %v1543, %v1539
        %v1684 = vpack.c.bf16 %v1544, %v1540
        %v1685 = vpack.c.bf16 %v1545, %v1541
        %v1686 = vpack.c.bf16 %v1550, %v1546
        %v1687 = vpack.c.bf16 %v1551, %v1547
        %v1688 = vpack.c.bf16 %v1552, %v1548
        %v1689 = vpack.c.bf16 %v1553, %v1549
        %v1690 = vpack.c.bf16 %v1558, %v1554
        %v1691 = vpack.c.bf16 %v1559, %v1555
        %v1692 = vpack.c.bf16 %v1560, %v1556
        %v1693 = vpack.c.bf16 %v1561, %v1557
        %v1694 = vpack.c.bf16 %v1566, %v1562
        %v1695 = vpack.c.bf16 %v1567, %v1563
        %v1696 = vpack.c.bf16 %v1568, %v1564
        %v1697 = vpack.c.bf16 %v1569, %v1565
        %v1698 = vld [vmem:[%s247] sm:$0xff]
        %v1699 = vld [vmem:[%s247 + $0x8] sm:$0xff]
        %v1700 = vld [vmem:[%s247 + $0x10] sm:$0xff]
        %v1701 = vld [vmem:[%s247 + $0x18] sm:$0xff]
        %v1702 = vld [vmem:[%s247 + $0x20] sm:$0xff]
        %v1703 = vld [vmem:[%s247 + $0x28] sm:$0xff]
        %v1704 = vld [vmem:[%s247 + $0x30] sm:$0xff]
        %v1705 = vld [vmem:[%s247 + $0x38] sm:$0xff]
        %v1706 = vld [vmem:[%s247 + $0x40] sm:$0xff]
        %v1707 = vld [vmem:[%s247 + $0x48] sm:$0xff]
        %v1708 = vld [vmem:[%s247 + $0x50] sm:$0xff]
        %v1709 = vld [vmem:[%s247 + $0x58] sm:$0xff]
        %v1710 = vld [vmem:[%s247 + $0x60] sm:$0xff]
        %v1711 = vld [vmem:[%s247 + $0x68] sm:$0xff]
        %v1712 = vld [vmem:[%s247 + $0x70] sm:$0xff]
        %v1713 = vld [vmem:[%s247 + $0x78] sm:$0xff]
        %v1714 = vld [vmem:[%s247 + $0x80] sm:$0xff]
        %v1715 = vld [vmem:[%s247 + $0x88] sm:$0xff]
        %v1716 = vld [vmem:[%s247 + $0x90] sm:$0xff]
        %v1717 = vld [vmem:[%s247 + $0x98] sm:$0xff]
        %v1718 = vld [vmem:[%s247 + $0xa0] sm:$0xff]
        %v1719 = vld [vmem:[%s247 + $0xa8] sm:$0xff]
        %v1720 = vld [vmem:[%s247 + $0xb0] sm:$0xff]
        %v1721 = vld [vmem:[%s247 + $0xb8] sm:$0xff]
        %v1722 = vld [vmem:[%s247 + $0xc0] sm:$0xff]
        %v1723 = vld [vmem:[%s247 + $0xc8] sm:$0xff]
        %v1724 = vld [vmem:[%s247 + $0xd0] sm:$0xff]
        %v1725 = vld [vmem:[%s247 + $0xd8] sm:$0xff]
        %v1726 = vld [vmem:[%s247 + $0xe0] sm:$0xff]
        %v1727 = vld [vmem:[%s247 + $0xe8] sm:$0xff]
        %v1728 = vld [vmem:[%s247 + $0xf0] sm:$0xff]
        %v1729 = vld [vmem:[%s247 + $0xf8] sm:$0xff]
        %v1730 = vld [vmem:[%s247 + $0x100] sm:$0xff]
        %v1731 = vld [vmem:[%s247 + $0x108] sm:$0xff]
        %v1732 = vld [vmem:[%s247 + $0x110] sm:$0xff]
        %v1733 = vld [vmem:[%s247 + $0x118] sm:$0xff]
        %v1734 = vld [vmem:[%s247 + $0x120] sm:$0xff]
        %v1735 = vld [vmem:[%s247 + $0x128] sm:$0xff]
        %v1736 = vld [vmem:[%s247 + $0x130] sm:$0xff]
        %v1737 = vld [vmem:[%s247 + $0x138] sm:$0xff]
        %v1738 = vld [vmem:[%s247 + $0x140] sm:$0xff]
        %v1739 = vld [vmem:[%s247 + $0x148] sm:$0xff]
        %v1740 = vld [vmem:[%s247 + $0x150] sm:$0xff]
        %v1741 = vld [vmem:[%s247 + $0x158] sm:$0xff]
        %v1742 = vld [vmem:[%s247 + $0x160] sm:$0xff]
        %v1743 = vld [vmem:[%s247 + $0x168] sm:$0xff]
        %v1744 = vld [vmem:[%s247 + $0x170] sm:$0xff]
        %v1745 = vld [vmem:[%s247 + $0x178] sm:$0xff]
        %v1746 = vld [vmem:[%s247 + $0x180] sm:$0xff]
        %v1747 = vld [vmem:[%s247 + $0x188] sm:$0xff]
        %v1748 = vld [vmem:[%s247 + $0x190] sm:$0xff]
        %v1749 = vld [vmem:[%s247 + $0x198] sm:$0xff]
        %v1750 = vld [vmem:[%s247 + $0x1a0] sm:$0xff]
        %v1751 = vld [vmem:[%s247 + $0x1a8] sm:$0xff]
        %v1752 = vld [vmem:[%s247 + $0x1b0] sm:$0xff]
        %v1753 = vld [vmem:[%s247 + $0x1b8] sm:$0xff]
        %v1754 = vld [vmem:[%s247 + $0x1c0] sm:$0xff]
        %v1755 = vld [vmem:[%s247 + $0x1c8] sm:$0xff]
        %v1756 = vld [vmem:[%s247 + $0x1d0] sm:$0xff]
        %v1757 = vld [vmem:[%s247 + $0x1d8] sm:$0xff]
        %v1758 = vld [vmem:[%s247 + $0x1e0] sm:$0xff]
        %v1759 = vld [vmem:[%s247 + $0x1e8] sm:$0xff]
        %v1760 = vld [vmem:[%s247 + $0x1f0] sm:$0xff]
        %v1761 = vld [vmem:[%s247 + $0x1f8] sm:$0xff]
        %v1826 = vunpack.c.l.b16 %v1698
        %v1827 = vunpack.c.h.b16 %v1698
        %v1828 = vunpack.c.l.b16 %v1699
        %v1829 = vunpack.c.h.b16 %v1699
        %v1830 = vunpack.c.l.b16 %v1700
        %v1831 = vunpack.c.h.b16 %v1700
        %v1832 = vunpack.c.l.b16 %v1701
        %v1833 = vunpack.c.h.b16 %v1701
        %v1834 = vunpack.c.l.b16 %v1702
        %v1835 = vunpack.c.h.b16 %v1702
        %v1836 = vunpack.c.l.b16 %v1703
        %v1837 = vunpack.c.h.b16 %v1703
        %v1838 = vunpack.c.l.b16 %v1704
        %v1839 = vunpack.c.h.b16 %v1704
        %v1840 = vunpack.c.l.b16 %v1705
        %v1841 = vunpack.c.h.b16 %v1705
        %v1842 = vunpack.c.l.b16 %v1706
        %v1843 = vunpack.c.h.b16 %v1706
        %v1844 = vunpack.c.l.b16 %v1707
        %v1845 = vunpack.c.h.b16 %v1707
        %v1846 = vunpack.c.l.b16 %v1708
        %v1847 = vunpack.c.h.b16 %v1708
        %v1848 = vunpack.c.l.b16 %v1709
        %v1849 = vunpack.c.h.b16 %v1709
        %v1850 = vunpack.c.l.b16 %v1710
        %v1851 = vunpack.c.h.b16 %v1710
        %v1852 = vunpack.c.l.b16 %v1711
        %v1853 = vunpack.c.h.b16 %v1711
        %v1854 = vunpack.c.l.b16 %v1712
        %v1855 = vunpack.c.h.b16 %v1712
        %v1856 = vunpack.c.l.b16 %v1713
        %v1857 = vunpack.c.h.b16 %v1713
        %v1858 = vunpack.c.l.b16 %v1714
        %v1859 = vunpack.c.h.b16 %v1714
        %v1860 = vunpack.c.l.b16 %v1715
        %v1861 = vunpack.c.h.b16 %v1715
        %v1862 = vunpack.c.l.b16 %v1716
        %v1863 = vunpack.c.h.b16 %v1716
        %v1864 = vunpack.c.l.b16 %v1717
        %v1865 = vunpack.c.h.b16 %v1717
        %v1866 = vunpack.c.l.b16 %v1718
        %v1867 = vunpack.c.h.b16 %v1718
        %v1868 = vunpack.c.l.b16 %v1719
        %v1869 = vunpack.c.h.b16 %v1719
        %v1870 = vunpack.c.l.b16 %v1720
        %v1871 = vunpack.c.h.b16 %v1720
        %v1872 = vunpack.c.l.b16 %v1721
        %v1873 = vunpack.c.h.b16 %v1721
        %v1874 = vunpack.c.l.b16 %v1722
        %v1875 = vunpack.c.h.b16 %v1722
        %v1876 = vunpack.c.l.b16 %v1723
        %v1877 = vunpack.c.h.b16 %v1723
        %v1878 = vunpack.c.l.b16 %v1724
        %v1879 = vunpack.c.h.b16 %v1724
        %v1880 = vunpack.c.l.b16 %v1725
        %v1881 = vunpack.c.h.b16 %v1725
        %v1882 = vunpack.c.l.b16 %v1726
        %v1883 = vunpack.c.h.b16 %v1726
        %v1884 = vunpack.c.l.b16 %v1727
        %v1885 = vunpack.c.h.b16 %v1727
        %v1886 = vunpack.c.l.b16 %v1728
        %v1887 = vunpack.c.h.b16 %v1728
        %v1888 = vunpack.c.l.b16 %v1729
        %v1889 = vunpack.c.h.b16 %v1729
        %v1890 = vunpack.c.l.b16 %v1730
        %v1891 = vunpack.c.h.b16 %v1730
        %v1892 = vunpack.c.l.b16 %v1731
        %v1893 = vunpack.c.h.b16 %v1731
        %v1894 = vunpack.c.l.b16 %v1732
        %v1895 = vunpack.c.h.b16 %v1732
        %v1896 = vunpack.c.l.b16 %v1733
        %v1897 = vunpack.c.h.b16 %v1733
        %v1898 = vunpack.c.l.b16 %v1734
        %v1899 = vunpack.c.h.b16 %v1734
        %v1900 = vunpack.c.l.b16 %v1735
        %v1901 = vunpack.c.h.b16 %v1735
        %v1902 = vunpack.c.l.b16 %v1736
        %v1903 = vunpack.c.h.b16 %v1736
        %v1904 = vunpack.c.l.b16 %v1737
        %v1905 = vunpack.c.h.b16 %v1737
        %v1906 = vunpack.c.l.b16 %v1738
        %v1907 = vunpack.c.h.b16 %v1738
        %v1908 = vunpack.c.l.b16 %v1739
        %v1909 = vunpack.c.h.b16 %v1739
        %v1910 = vunpack.c.l.b16 %v1740
        %v1911 = vunpack.c.h.b16 %v1740
        %v1912 = vunpack.c.l.b16 %v1741
        %v1913 = vunpack.c.h.b16 %v1741
        %v1914 = vunpack.c.l.b16 %v1742
        %v1915 = vunpack.c.h.b16 %v1742
        %v1916 = vunpack.c.l.b16 %v1743
        %v1917 = vunpack.c.h.b16 %v1743
        %v1918 = vunpack.c.l.b16 %v1744
        %v1919 = vunpack.c.h.b16 %v1744
        %v1920 = vunpack.c.l.b16 %v1745
        %v1921 = vunpack.c.h.b16 %v1745
        %v1922 = vunpack.c.l.b16 %v1746
        %v1923 = vunpack.c.h.b16 %v1746
        %v1924 = vunpack.c.l.b16 %v1747
        %v1925 = vunpack.c.h.b16 %v1747
        %v1926 = vunpack.c.l.b16 %v1748
        %v1927 = vunpack.c.h.b16 %v1748
        %v1928 = vunpack.c.l.b16 %v1749
        %v1929 = vunpack.c.h.b16 %v1749
        %v1930 = vunpack.c.l.b16 %v1750
        %v1931 = vunpack.c.h.b16 %v1750
        %v1932 = vunpack.c.l.b16 %v1751
        %v1933 = vunpack.c.h.b16 %v1751
        %v1934 = vunpack.c.l.b16 %v1752
        %v1935 = vunpack.c.h.b16 %v1752
        %v1936 = vunpack.c.l.b16 %v1753
        %v1937 = vunpack.c.h.b16 %v1753
        %v1938 = vunpack.c.l.b16 %v1754
        %v1939 = vunpack.c.h.b16 %v1754
        %v1940 = vunpack.c.l.b16 %v1755
        %v1941 = vunpack.c.h.b16 %v1755
        %v1942 = vunpack.c.l.b16 %v1756
        %v1943 = vunpack.c.h.b16 %v1756
        %v1944 = vunpack.c.l.b16 %v1757
        %v1945 = vunpack.c.h.b16 %v1757
        %v1946 = vunpack.c.l.b16 %v1758
        %v1947 = vunpack.c.h.b16 %v1758
        %v1948 = vunpack.c.l.b16 %v1759
        %v1949 = vunpack.c.h.b16 %v1759
        %v1950 = vunpack.c.l.b16 %v1760
        %v1951 = vunpack.c.h.b16 %v1760
        %v1952 = vunpack.c.l.b16 %v1761
        %v1953 = vunpack.c.h.b16 %v1761
        %v1954 = vpack.c.b16 %v1828, %v1826
        %v1955 = vpack.c.b16 %v1829, %v1827
        %v1956 = vpack.c.b16 %v1832, %v1830
        %v1957 = vpack.c.b16 %v1833, %v1831
        %v1958 = vpack.c.b16 %v1836, %v1834
        %v1959 = vpack.c.b16 %v1837, %v1835
        %v1960 = vpack.c.b16 %v1840, %v1838
        %v1961 = vpack.c.b16 %v1841, %v1839
        %v1962 = vpack.c.b16 %v1844, %v1842
        %v1963 = vpack.c.b16 %v1845, %v1843
        %v1964 = vpack.c.b16 %v1848, %v1846
        %v1965 = vpack.c.b16 %v1849, %v1847
        %v1966 = vpack.c.b16 %v1852, %v1850
        %v1967 = vpack.c.b16 %v1853, %v1851
        %v1968 = vpack.c.b16 %v1856, %v1854
        %v1969 = vpack.c.b16 %v1857, %v1855
        %v1970 = vpack.c.b16 %v1860, %v1858
        %v1971 = vpack.c.b16 %v1861, %v1859
        %v1972 = vpack.c.b16 %v1864, %v1862
        %v1973 = vpack.c.b16 %v1865, %v1863
        %v1974 = vpack.c.b16 %v1868, %v1866
        %v1975 = vpack.c.b16 %v1869, %v1867
        %v1976 = vpack.c.b16 %v1872, %v1870
        %v1977 = vpack.c.b16 %v1873, %v1871
        %v1978 = vpack.c.b16 %v1876, %v1874
        %v1979 = vpack.c.b16 %v1877, %v1875
        %v1980 = vpack.c.b16 %v1880, %v1878
        %v1981 = vpack.c.b16 %v1881, %v1879
        %v1982 = vpack.c.b16 %v1884, %v1882
        %v1983 = vpack.c.b16 %v1885, %v1883
        %v1984 = vpack.c.b16 %v1888, %v1886
        %v1985 = vpack.c.b16 %v1889, %v1887
        %v1986 = vpack.c.b16 %v1892, %v1890
        %v1987 = vpack.c.b16 %v1893, %v1891
        %v1988 = vpack.c.b16 %v1896, %v1894
        %v1989 = vpack.c.b16 %v1897, %v1895
        %v1990 = vpack.c.b16 %v1900, %v1898
        %v1991 = vpack.c.b16 %v1901, %v1899
        %v1992 = vpack.c.b16 %v1904, %v1902
        %v1993 = vpack.c.b16 %v1905, %v1903
        %v1994 = vpack.c.b16 %v1908, %v1906
        %v1995 = vpack.c.b16 %v1909, %v1907
        %v1996 = vpack.c.b16 %v1912, %v1910
        %v1997 = vpack.c.b16 %v1913, %v1911
        %v1998 = vpack.c.b16 %v1916, %v1914
        %v1999 = vpack.c.b16 %v1917, %v1915
        %v2000 = vpack.c.b16 %v1920, %v1918
        %v2001 = vpack.c.b16 %v1921, %v1919
        %v2002 = vpack.c.b16 %v1924, %v1922
        %v2003 = vpack.c.b16 %v1925, %v1923
        %v2004 = vpack.c.b16 %v1928, %v1926
        %v2005 = vpack.c.b16 %v1929, %v1927
        %v2006 = vpack.c.b16 %v1932, %v1930
        %v2007 = vpack.c.b16 %v1933, %v1931
        %v2008 = vpack.c.b16 %v1936, %v1934
        %v2009 = vpack.c.b16 %v1937, %v1935
        %v2010 = vpack.c.b16 %v1940, %v1938
        %v2011 = vpack.c.b16 %v1941, %v1939
        %v2012 = vpack.c.b16 %v1944, %v1942
        %v2013 = vpack.c.b16 %v1945, %v1943
        %v2014 = vpack.c.b16 %v1948, %v1946
        %v2015 = vpack.c.b16 %v1949, %v1947
        %v2016 = vpack.c.b16 %v1952, %v1950
        %v2017 = vpack.c.b16 %v1953, %v1951
        %2082 = vmatprep.subr.bf16.mxu0 %v1955
        %2083 = vmatpush1.bf16.msra.mxu0 %v1954
        %2084 = vmatprep.subr.bf16.mxu0 %v1957
        %2085 = vmatpush1.bf16.msra.mxu0 %v1956
        %2086 = vmatprep.subr.bf16.mxu0 %v1959
        %2087 = vmatpush1.bf16.msra.mxu0 %v1958
        %2088 = vmatprep.subr.bf16.mxu0 %v1961
        %2089 = vmatpush1.bf16.msra.mxu0 %v1960
        %2090 = vmatprep.subr.bf16.mxu0 %v1963
        %2091 = vmatpush1.bf16.msra.mxu0 %v1962
        %2092 = vmatprep.subr.bf16.mxu0 %v1965
        %2093 = vmatpush1.bf16.msra.mxu0 %v1964
        %2094 = vmatprep.subr.bf16.mxu0 %v1967
        %2095 = vmatpush1.bf16.msra.mxu0 %v1966
        %2096 = vmatprep.subr.bf16.mxu0 %v1969
        %2097 = vmatpush1.bf16.msra.mxu0 %v1968
        %2098 = vmatprep.subr.bf16.mxu0 %v1971
        %2099 = vmatpush1.bf16.msra.mxu0 %v1970
        %2100 = vmatprep.subr.bf16.mxu0 %v1973
        %2101 = vmatpush1.bf16.msra.mxu0 %v1972
        %2102 = vmatprep.subr.bf16.mxu0 %v1975
        %2103 = vmatpush1.bf16.msra.mxu0 %v1974
        %2104 = vmatprep.subr.bf16.mxu0 %v1977
        %2105 = vmatpush1.bf16.msra.mxu0 %v1976
        %2106 = vmatprep.subr.bf16.mxu0 %v1979
        %2107 = vmatpush1.bf16.msra.mxu0 %v1978
        %2108 = vmatprep.subr.bf16.mxu0 %v1981
        %2109 = vmatpush1.bf16.msra.mxu0 %v1980
        %2110 = vmatprep.subr.bf16.mxu0 %v1983
        %2111 = vmatpush1.bf16.msra.mxu0 %v1982
        %2112 = vmatprep.subr.bf16.mxu0 %v1985
        %2113 = vmatpush1.bf16.msra.mxu0 %v1984
        %2114 = vmatprep.mubr.bf16.mxu0 %v1635
        %2115 = vmatmul.mubr.bf16.gmra.mrb[0].mxu0 %v1634
        %v2116 = vpop.f32.mrb[0].mxu0
        %v2117 = vadd.f32 0.0, %v2116
        %v2118 = vpop.f32.mrb[0].mxu0
        %v2119 = vadd.f32 0.0, %v2118
        %v2120 = vpop.f32.mrb[0].mxu0
        %v2121 = vadd.f32 0.0, %v2120
        %v2122 = vpop.f32.mrb[0].mxu0
        %v2123 = vadd.f32 0.0, %v2122
        %2124 = vmatprep.mubr.bf16.mxu0 %v1639
        %2125 = vmatmul.mubr.bf16.gmra.mrb[0].mxu0 %v1638
        %v2126 = vpop.f32.mrb[0].mxu0
        %v2127 = vadd.f32 0.0, %v2126
        %v2128 = vpop.f32.mrb[0].mxu0
        %v2129 = vadd.f32 0.0, %v2128
        %v2130 = vpop.f32.mrb[0].mxu0
        %v2131 = vadd.f32 0.0, %v2130
        %v2132 = vpop.f32.mrb[0].mxu0
        %v2133 = vadd.f32 0.0, %v2132
        %2134 = vmatprep.mubr.bf16.mxu0 %v1643
        %2135 = vmatmul.mubr.bf16.gmra.mrb[0].mxu0 %v1642
        %v2136 = vpop.f32.mrb[0].mxu0
        %v2137 = vadd.f32 0.0, %v2136
        %v2138 = vpop.f32.mrb[0].mxu0
        %v2139 = vadd.f32 0.0, %v2138
        %v2140 = vpop.f32.mrb[0].mxu0
        %v2141 = vadd.f32 0.0, %v2140
        %v2142 = vpop.f32.mrb[0].mxu0
        %v2143 = vadd.f32 0.0, %v2142
        %2144 = vmatprep.mubr.bf16.mxu0 %v1647
        %2145 = vmatmul.mubr.bf16.gmra.mrb[0].mxu0 %v1646
        %v2146 = vpop.f32.mrb[0].mxu0
        %v2147 = vadd.f32 0.0, %v2146
        %v2148 = vpop.f32.mrb[0].mxu0
        %v2149 = vadd.f32 0.0, %v2148
        %v2150 = vpop.f32.mrb[0].mxu0
        %v2151 = vadd.f32 0.0, %v2150
        %v2152 = vpop.f32.mrb[0].mxu0
        %v2153 = vadd.f32 0.0, %v2152
        %2154 = vmatprep.mubr.bf16.mxu0 %v1651
        %2155 = vmatmul.mubr.bf16.gmra.mrb[0].mxu0 %v1650
        %v2156 = vpop.f32.mrb[0].mxu0
        %v2157 = vadd.f32 0.0, %v2156
        %v2158 = vpop.f32.mrb[0].mxu0
        %v2159 = vadd.f32 0.0, %v2158
        %v2160 = vpop.f32.mrb[0].mxu0
        %v2161 = vadd.f32 0.0, %v2160
        %v2162 = vpop.f32.mrb[0].mxu0
        %v2163 = vadd.f32 0.0, %v2162
        %2164 = vmatprep.mubr.bf16.mxu0 %v1655
        %2165 = vmatmul.mubr.bf16.gmra.mrb[0].mxu0 %v1654
        %v2166 = vpop.f32.mrb[0].mxu0
        %v2167 = vadd.f32 0.0, %v2166
        %v2168 = vpop.f32.mrb[0].mxu0
        %v2169 = vadd.f32 0.0, %v2168
        %v2170 = vpop.f32.mrb[0].mxu0
        %v2171 = vadd.f32 0.0, %v2170
        %v2172 = vpop.f32.mrb[0].mxu0
        %v2173 = vadd.f32 0.0, %v2172
        %2174 = vmatprep.mubr.bf16.mxu0 %v1659
        %2175 = vmatmul.mubr.bf16.gmra.mrb[0].mxu0 %v1658
        %v2176 = vpop.f32.mrb[0].mxu0
        %v2177 = vadd.f32 0.0, %v2176
        %v2178 = vpop.f32.mrb[0].mxu0
        %v2179 = vadd.f32 0.0, %v2178
        %v2180 = vpop.f32.mrb[0].mxu0
        %v2181 = vadd.f32 0.0, %v2180
        %v2182 = vpop.f32.mrb[0].mxu0
        %v2183 = vadd.f32 0.0, %v2182
        %2184 = vmatprep.mubr.bf16.mxu0 %v1663
        %2185 = vmatmul.mubr.bf16.gmra.mrb[0].mxu0 %v1662
        %v2186 = vpop.f32.mrb[0].mxu0
        %v2187 = vadd.f32 0.0, %v2186
        %v2188 = vpop.f32.mrb[0].mxu0
        %v2189 = vadd.f32 0.0, %v2188
        %v2190 = vpop.f32.mrb[0].mxu0
        %v2191 = vadd.f32 0.0, %v2190
        %v2192 = vpop.f32.mrb[0].mxu0
        %v2193 = vadd.f32 0.0, %v2192
        %2194 = vmatprep.mubr.bf16.mxu0 %v1667
        %2195 = vmatmul.mubr.bf16.gmra.mrb[0].mxu0 %v1666
        %v2196 = vpop.f32.mrb[0].mxu0
        %v2197 = vadd.f32 0.0, %v2196
        %v2198 = vpop.f32.mrb[0].mxu0
        %v2199 = vadd.f32 0.0, %v2198
        %v2200 = vpop.f32.mrb[0].mxu0
        %v2201 = vadd.f32 0.0, %v2200
        %v2202 = vpop.f32.mrb[0].mxu0
        %v2203 = vadd.f32 0.0, %v2202
        %2204 = vmatprep.mubr.bf16.mxu0 %v1671
        %2205 = vmatmul.mubr.bf16.gmra.mrb[0].mxu0 %v1670
        %v2206 = vpop.f32.mrb[0].mxu0
        %v2207 = vadd.f32 0.0, %v2206
        %v2208 = vpop.f32.mrb[0].mxu0
        %v2209 = vadd.f32 0.0, %v2208
        %v2210 = vpop.f32.mrb[0].mxu0
        %v2211 = vadd.f32 0.0, %v2210
        %v2212 = vpop.f32.mrb[0].mxu0
        %v2213 = vadd.f32 0.0, %v2212
        %2214 = vmatprep.mubr.bf16.mxu0 %v1675
        %2215 = vmatmul.mubr.bf16.gmra.mrb[0].mxu0 %v1674
        %v2216 = vpop.f32.mrb[0].mxu0
        %v2217 = vadd.f32 0.0, %v2216
        %v2218 = vpop.f32.mrb[0].mxu0
        %v2219 = vadd.f32 0.0, %v2218
        %v2220 = vpop.f32.mrb[0].mxu0
        %v2221 = vadd.f32 0.0, %v2220
        %v2222 = vpop.f32.mrb[0].mxu0
        %v2223 = vadd.f32 0.0, %v2222
        %2224 = vmatprep.mubr.bf16.mxu0 %v1679
        %2225 = vmatmul.mubr.bf16.gmra.mrb[0].mxu0 %v1678
        %v2226 = vpop.f32.mrb[0].mxu0
        %v2227 = vadd.f32 0.0, %v2226
        %v2228 = vpop.f32.mrb[0].mxu0
        %v2229 = vadd.f32 0.0, %v2228
        %v2230 = vpop.f32.mrb[0].mxu0
        %v2231 = vadd.f32 0.0, %v2230
        %v2232 = vpop.f32.mrb[0].mxu0
        %v2233 = vadd.f32 0.0, %v2232
        %2234 = vmatprep.mubr.bf16.mxu0 %v1683
        %2235 = vmatmul.mubr.bf16.gmra.mrb[0].mxu0 %v1682
        %v2236 = vpop.f32.mrb[0].mxu0
        %v2237 = vadd.f32 0.0, %v2236
        %v2238 = vpop.f32.mrb[0].mxu0
        %v2239 = vadd.f32 0.0, %v2238
        %v2240 = vpop.f32.mrb[0].mxu0
        %v2241 = vadd.f32 0.0, %v2240
        %v2242 = vpop.f32.mrb[0].mxu0
        %v2243 = vadd.f32 0.0, %v2242
        %2244 = vmatprep.mubr.bf16.mxu0 %v1687
        %2245 = vmatmul.mubr.bf16.gmra.mrb[0].mxu0 %v1686
        %v2246 = vpop.f32.mrb[0].mxu0
        %v2247 = vadd.f32 0.0, %v2246
        %v2248 = vpop.f32.mrb[0].mxu0
        %v2249 = vadd.f32 0.0, %v2248
        %v2250 = vpop.f32.mrb[0].mxu0
        %v2251 = vadd.f32 0.0, %v2250
        %v2252 = vpop.f32.mrb[0].mxu0
        %v2253 = vadd.f32 0.0, %v2252
        %2254 = vmatprep.mubr.bf16.mxu0 %v1691
        %2255 = vmatmul.mubr.bf16.gmra.mrb[0].mxu0 %v1690
        %v2256 = vpop.f32.mrb[0].mxu0
        %v2257 = vadd.f32 0.0, %v2256
        %v2258 = vpop.f32.mrb[0].mxu0
        %v2259 = vadd.f32 0.0, %v2258
        %v2260 = vpop.f32.mrb[0].mxu0
        %v2261 = vadd.f32 0.0, %v2260
        %v2262 = vpop.f32.mrb[0].mxu0
        %v2263 = vadd.f32 0.0, %v2262
        %2264 = vmatprep.mubr.bf16.mxu0 %v1695
        %2265 = vmatmul.mubr.bf16.gmra.mrb[0].mxu0 %v1694
        %v2266 = vpop.f32.mrb[0].mxu0
        %v2267 = vadd.f32 0.0, %v2266
        %v2268 = vpop.f32.mrb[0].mxu0
        %v2269 = vadd.f32 0.0, %v2268
        %v2270 = vpop.f32.mrb[0].mxu0
        %v2271 = vadd.f32 0.0, %v2270
        %v2272 = vpop.f32.mrb[0].mxu0
        %v2273 = vadd.f32 0.0, %v2272
        %2274 = vdwg.mxu0
        %2275 = vmatprep.subr.bf16.mxu0 %v1987
        %2276 = vmatpush1.bf16.msra.mxu0 %v1986
        %2277 = vmatprep.subr.bf16.mxu0 %v1989
        %2278 = vmatpush1.bf16.msra.mxu0 %v1988
        %2279 = vmatprep.subr.bf16.mxu0 %v1991
        %2280 = vmatpush1.bf16.msra.mxu0 %v1990
        %2281 = vmatprep.subr.bf16.mxu0 %v1993
        %2282 = vmatpush1.bf16.msra.mxu0 %v1992
        %2283 = vmatprep.subr.bf16.mxu0 %v1995
        %2284 = vmatpush1.bf16.msra.mxu0 %v1994
        %2285 = vmatprep.subr.bf16.mxu0 %v1997
        %2286 = vmatpush1.bf16.msra.mxu0 %v1996
        %2287 = vmatprep.subr.bf16.mxu0 %v1999
        %2288 = vmatpush1.bf16.msra.mxu0 %v1998
        %2289 = vmatprep.subr.bf16.mxu0 %v2001
        %2290 = vmatpush1.bf16.msra.mxu0 %v2000
        %2291 = vmatprep.subr.bf16.mxu0 %v2003
        %2292 = vmatpush1.bf16.msra.mxu0 %v2002
        %2293 = vmatprep.subr.bf16.mxu0 %v2005
        %2294 = vmatpush1.bf16.msra.mxu0 %v2004
        %2295 = vmatprep.subr.bf16.mxu0 %v2007
        %2296 = vmatpush1.bf16.msra.mxu0 %v2006
        %2297 = vmatprep.subr.bf16.mxu0 %v2009
        %2298 = vmatpush1.bf16.msra.mxu0 %v2008
        %2299 = vmatprep.subr.bf16.mxu0 %v2011
        %2300 = vmatpush1.bf16.msra.mxu0 %v2010
        %2301 = vmatprep.subr.bf16.mxu0 %v2013
        %2302 = vmatpush1.bf16.msra.mxu0 %v2012
        %2303 = vmatprep.subr.bf16.mxu0 %v2015
        %2304 = vmatpush1.bf16.msra.mxu0 %v2014
        %2305 = vmatprep.subr.bf16.mxu0 %v2017
        %2306 = vmatpush1.bf16.msra.mxu0 %v2016
        %2307 = vmatprep.mubr.bf16.mxu0 %v1637
        %2308 = vmatmul.mubr.bf16.gmra.mrb[0].mxu0 %v1636
        %v2309 = vpop.f32.mrb[0].mxu0
        %v2310 = vadd.f32 %v2117, %v2309
        %v2311 = vpop.f32.mrb[0].mxu0
        %v2312 = vadd.f32 %v2119, %v2311
        %v2313 = vpop.f32.mrb[0].mxu0
        %v2314 = vadd.f32 %v2121, %v2313
        %v2315 = vpop.f32.mrb[0].mxu0
        %v2316 = vadd.f32 %v2123, %v2315
        %2317 = vmatprep.mubr.bf16.mxu0 %v1641
        %2318 = vmatmul.mubr.bf16.gmra.mrb[0].mxu0 %v1640
        %v2319 = vpop.f32.mrb[0].mxu0
        %v2320 = vadd.f32 %v2127, %v2319
        %v2321 = vpop.f32.mrb[0].mxu0
        %v2322 = vadd.f32 %v2129, %v2321
        %v2323 = vpop.f32.mrb[0].mxu0
        %v2324 = vadd.f32 %v2131, %v2323
        %v2325 = vpop.f32.mrb[0].mxu0
        %v2326 = vadd.f32 %v2133, %v2325
        %2327 = vmatprep.mubr.bf16.mxu0 %v1645
        %2328 = vmatmul.mubr.bf16.gmra.mrb[0].mxu0 %v1644
        %v2329 = vpop.f32.mrb[0].mxu0
        %v2330 = vadd.f32 %v2137, %v2329
        %v2331 = vpop.f32.mrb[0].mxu0
        %v2332 = vadd.f32 %v2139, %v2331
        %v2333 = vpop.f32.mrb[0].mxu0
        %v2334 = vadd.f32 %v2141, %v2333
        %v2335 = vpop.f32.mrb[0].mxu0
        %v2336 = vadd.f32 %v2143, %v2335
        %2337 = vmatprep.mubr.bf16.mxu0 %v1649
        %2338 = vmatmul.mubr.bf16.gmra.mrb[0].mxu0 %v1648
        %v2339 = vpop.f32.mrb[0].mxu0
        %v2340 = vadd.f32 %v2147, %v2339
        %v2341 = vpop.f32.mrb[0].mxu0
        %v2342 = vadd.f32 %v2149, %v2341
        %v2343 = vpop.f32.mrb[0].mxu0
        %v2344 = vadd.f32 %v2151, %v2343
        %v2345 = vpop.f32.mrb[0].mxu0
        %v2346 = vadd.f32 %v2153, %v2345
        %2347 = vmatprep.mubr.bf16.mxu0 %v1653
        %2348 = vmatmul.mubr.bf16.gmra.mrb[0].mxu0 %v1652
        %v2349 = vpop.f32.mrb[0].mxu0
        %v2350 = vadd.f32 %v2157, %v2349
        %v2351 = vpop.f32.mrb[0].mxu0
        %v2352 = vadd.f32 %v2159, %v2351
        %v2353 = vpop.f32.mrb[0].mxu0
        %v2354 = vadd.f32 %v2161, %v2353
        %v2355 = vpop.f32.mrb[0].mxu0
        %v2356 = vadd.f32 %v2163, %v2355
        %2357 = vmatprep.mubr.bf16.mxu0 %v1657
        %2358 = vmatmul.mubr.bf16.gmra.mrb[0].mxu0 %v1656
        %v2359 = vpop.f32.mrb[0].mxu0
        %v2360 = vadd.f32 %v2167, %v2359
        %v2361 = vpop.f32.mrb[0].mxu0
        %v2362 = vadd.f32 %v2169, %v2361
        %v2363 = vpop.f32.mrb[0].mxu0
        %v2364 = vadd.f32 %v2171, %v2363
        %v2365 = vpop.f32.mrb[0].mxu0
        %v2366 = vadd.f32 %v2173, %v2365
        %2367 = vmatprep.mubr.bf16.mxu0 %v1661
        %2368 = vmatmul.mubr.bf16.gmra.mrb[0].mxu0 %v1660
        %v2369 = vpop.f32.mrb[0].mxu0
        %v2370 = vadd.f32 %v2177, %v2369
        %v2371 = vpop.f32.mrb[0].mxu0
        %v2372 = vadd.f32 %v2179, %v2371
        %v2373 = vpop.f32.mrb[0].mxu0
        %v2374 = vadd.f32 %v2181, %v2373
        %v2375 = vpop.f32.mrb[0].mxu0
        %v2376 = vadd.f32 %v2183, %v2375
        %2377 = vmatprep.mubr.bf16.mxu0 %v1665
        %2378 = vmatmul.mubr.bf16.gmra.mrb[0].mxu0 %v1664
        %v2379 = vpop.f32.mrb[0].mxu0
        %v2380 = vadd.f32 %v2187, %v2379
        %v2381 = vpop.f32.mrb[0].mxu0
        %v2382 = vadd.f32 %v2189, %v2381
        %v2383 = vpop.f32.mrb[0].mxu0
        %v2384 = vadd.f32 %v2191, %v2383
        %v2385 = vpop.f32.mrb[0].mxu0
        %v2386 = vadd.f32 %v2193, %v2385
        %2387 = vmatprep.mubr.bf16.mxu0 %v1669
        %2388 = vmatmul.mubr.bf16.gmra.mrb[0].mxu0 %v1668
        %v2389 = vpop.f32.mrb[0].mxu0
        %v2390 = vadd.f32 %v2197, %v2389
        %v2391 = vpop.f32.mrb[0].mxu0
        %v2392 = vadd.f32 %v2199, %v2391
        %v2393 = vpop.f32.mrb[0].mxu0
        %v2394 = vadd.f32 %v2201, %v2393
        %v2395 = vpop.f32.mrb[0].mxu0
        %v2396 = vadd.f32 %v2203, %v2395
        %2397 = vmatprep.mubr.bf16.mxu0 %v1673
        %2398 = vmatmul.mubr.bf16.gmra.mrb[0].mxu0 %v1672
        %v2399 = vpop.f32.mrb[0].mxu0
        %v2400 = vadd.f32 %v2207, %v2399
        %v2401 = vpop.f32.mrb[0].mxu0
        %v2402 = vadd.f32 %v2209, %v2401
        %v2403 = vpop.f32.mrb[0].mxu0
        %v2404 = vadd.f32 %v2211, %v2403
        %v2405 = vpop.f32.mrb[0].mxu0
        %v2406 = vadd.f32 %v2213, %v2405
        %2407 = vmatprep.mubr.bf16.mxu0 %v1677
        %2408 = vmatmul.mubr.bf16.gmra.mrb[0].mxu0 %v1676
        %v2409 = vpop.f32.mrb[0].mxu0
        %v2410 = vadd.f32 %v2217, %v2409
        %v2411 = vpop.f32.mrb[0].mxu0
        %v2412 = vadd.f32 %v2219, %v2411
        %v2413 = vpop.f32.mrb[0].mxu0
        %v2414 = vadd.f32 %v2221, %v2413
        %v2415 = vpop.f32.mrb[0].mxu0
        %v2416 = vadd.f32 %v2223, %v2415
        %2417 = vmatprep.mubr.bf16.mxu0 %v1681
        %2418 = vmatmul.mubr.bf16.gmra.mrb[0].mxu0 %v1680
        %v2419 = vpop.f32.mrb[0].mxu0
        %v2420 = vadd.f32 %v2227, %v2419
        %v2421 = vpop.f32.mrb[0].mxu0
        %v2422 = vadd.f32 %v2229, %v2421
        %v2423 = vpop.f32.mrb[0].mxu0
        %v2424 = vadd.f32 %v2231, %v2423
        %v2425 = vpop.f32.mrb[0].mxu0
        %v2426 = vadd.f32 %v2233, %v2425
        %2427 = vmatprep.mubr.bf16.mxu0 %v1685
        %2428 = vmatmul.mubr.bf16.gmra.mrb[0].mxu0 %v1684
        %v2429 = vpop.f32.mrb[0].mxu0
        %v2430 = vadd.f32 %v2237, %v2429
        %v2431 = vpop.f32.mrb[0].mxu0
        %v2432 = vadd.f32 %v2239, %v2431
        %v2433 = vpop.f32.mrb[0].mxu0
        %v2434 = vadd.f32 %v2241, %v2433
        %v2435 = vpop.f32.mrb[0].mxu0
        %v2436 = vadd.f32 %v2243, %v2435
        %2437 = vmatprep.mubr.bf16.mxu0 %v1689
        %2438 = vmatmul.mubr.bf16.gmra.mrb[0].mxu0 %v1688
        %v2439 = vpop.f32.mrb[0].mxu0
        %v2440 = vadd.f32 %v2247, %v2439
        %v2441 = vpop.f32.mrb[0].mxu0
        %v2442 = vadd.f32 %v2249, %v2441
        %v2443 = vpop.f32.mrb[0].mxu0
        %v2444 = vadd.f32 %v2251, %v2443
        %v2445 = vpop.f32.mrb[0].mxu0
        %v2446 = vadd.f32 %v2253, %v2445
        %2447 = vmatprep.mubr.bf16.mxu0 %v1693
        %2448 = vmatmul.mubr.bf16.gmra.mrb[0].mxu0 %v1692
        %v2449 = vpop.f32.mrb[0].mxu0
        %v2450 = vadd.f32 %v2257, %v2449
        %v2451 = vpop.f32.mrb[0].mxu0
        %v2452 = vadd.f32 %v2259, %v2451
        %v2453 = vpop.f32.mrb[0].mxu0
        %v2454 = vadd.f32 %v2261, %v2453
        %v2455 = vpop.f32.mrb[0].mxu0
        %v2456 = vadd.f32 %v2263, %v2455
        %2457 = vmatprep.mubr.bf16.mxu0 %v1697
        %2458 = vmatmul.mubr.bf16.gmra.mrb[0].mxu0 %v1696
        %v2459 = vpop.f32.mrb[0].mxu0
        %v2460 = vadd.f32 %v2267, %v2459
        %v2461 = vpop.f32.mrb[0].mxu0
        %v2462 = vadd.f32 %v2269, %v2461
        %v2463 = vpop.f32.mrb[0].mxu0
        %v2464 = vadd.f32 %v2271, %v2463
        %v2465 = vpop.f32.mrb[0].mxu0
        %v2466 = vadd.f32 %v2273, %v2465
        %2467 = vdwg.mxu0
        %v2468 = vadd.f32 %v1570, %v2310
        %v2469 = vadd.f32 %v1571, %v2312
        %v2470 = vadd.f32 %v1572, %v2314
        %v2471 = vadd.f32 %v1573, %v2316
        %v2472 = vadd.f32 %v1574, %v2320
        %v2473 = vadd.f32 %v1575, %v2322
        %v2474 = vadd.f32 %v1576, %v2324
        %v2475 = vadd.f32 %v1577, %v2326
        %v2476 = vadd.f32 %v1578, %v2330
        %v2477 = vadd.f32 %v1579, %v2332
        %v2478 = vadd.f32 %v1580, %v2334
        %v2479 = vadd.f32 %v1581, %v2336
        %v2480 = vadd.f32 %v1582, %v2340
        %v2481 = vadd.f32 %v1583, %v2342
        %v2482 = vadd.f32 %v1584, %v2344
        %v2483 = vadd.f32 %v1585, %v2346
        %v2484 = vadd.f32 %v1586, %v2350
        %v2485 = vadd.f32 %v1587, %v2352
        %v2486 = vadd.f32 %v1588, %v2354
        %v2487 = vadd.f32 %v1589, %v2356
        %v2488 = vadd.f32 %v1590, %v2360
        %v2489 = vadd.f32 %v1591, %v2362
        %v2490 = vadd.f32 %v1592, %v2364
        %v2491 = vadd.f32 %v1593, %v2366
        %v2492 = vadd.f32 %v1594, %v2370
        %v2493 = vadd.f32 %v1595, %v2372
        %v2494 = vadd.f32 %v1596, %v2374
        %v2495 = vadd.f32 %v1597, %v2376
        %v2496 = vadd.f32 %v1598, %v2380
        %v2497 = vadd.f32 %v1599, %v2382
        %v2498 = vadd.f32 %v1600, %v2384
        %v2499 = vadd.f32 %v1601, %v2386
        %v2500 = vadd.f32 %v1602, %v2390
        %v2501 = vadd.f32 %v1603, %v2392
        %v2502 = vadd.f32 %v1604, %v2394
        %v2503 = vadd.f32 %v1605, %v2396
        %v2504 = vadd.f32 %v1606, %v2400
        %v2505 = vadd.f32 %v1607, %v2402
        %v2506 = vadd.f32 %v1608, %v2404
        %v2507 = vadd.f32 %v1609, %v2406
        %v2508 = vadd.f32 %v1610, %v2410
        %v2509 = vadd.f32 %v1611, %v2412
        %v2510 = vadd.f32 %v1612, %v2414
        %v2511 = vadd.f32 %v1613, %v2416
        %v2512 = vadd.f32 %v1614, %v2420
        %v2513 = vadd.f32 %v1615, %v2422
        %v2514 = vadd.f32 %v1616, %v2424
        %v2515 = vadd.f32 %v1617, %v2426
        %v2516 = vadd.f32 %v1618, %v2430
        %v2517 = vadd.f32 %v1619, %v2432
        %v2518 = vadd.f32 %v1620, %v2434
        %v2519 = vadd.f32 %v1621, %v2436
        %v2520 = vadd.f32 %v1622, %v2440
        %v2521 = vadd.f32 %v1623, %v2442
        %v2522 = vadd.f32 %v1624, %v2444
        %v2523 = vadd.f32 %v1625, %v2446
        %v2524 = vadd.f32 %v1626, %v2450
        %v2525 = vadd.f32 %v1627, %v2452
        %v2526 = vadd.f32 %v1628, %v2454
        %v2527 = vadd.f32 %v1629, %v2456
        %v2528 = vadd.f32 %v1630, %v2460
        %v2529 = vadd.f32 %v1631, %v2462
        %v2530 = vadd.f32 %v1632, %v2464
        %v2531 = vadd.f32 %v1633, %v2466
        %2532 = vst [vmem:[#allocation2] sm:$0xff] %v2468
        %2533 = vst [vmem:[#allocation2 + $0x8] sm:$0xff] %v2469
        %2534 = vst [vmem:[#allocation2 + $0x10] sm:$0xff] %v2470
        %2535 = vst [vmem:[#allocation2 + $0x18] sm:$0xff] %v2471
        %2536 = vst [vmem:[#allocation2 + $0x20] sm:$0xff] %v2472
        %2537 = vst [vmem:[#allocation2 + $0x28] sm:$0xff] %v2473
        %2538 = vst [vmem:[#allocation2 + $0x30] sm:$0xff] %v2474
        %2539 = vst [vmem:[#allocation2 + $0x38] sm:$0xff] %v2475
        %2540 = vst [vmem:[#allocation2 + $0x40] sm:$0xff] %v2476
        %2541 = vst [vmem:[#allocation2 + $0x48] sm:$0xff] %v2477
        %2542 = vst [vmem:[#allocation2 + $0x50] sm:$0xff] %v2478
        %2543 = vst [vmem:[#allocation2 + $0x58] sm:$0xff] %v2479
        %2544 = vst [vmem:[#allocation2 + $0x60] sm:$0xff] %v2480
        %2545 = vst [vmem:[#allocation2 + $0x68] sm:$0xff] %v2481
        %2546 = vst [vmem:[#allocation2 + $0x70] sm:$0xff] %v2482
        %2547 = vst [vmem:[#allocation2 + $0x78] sm:$0xff] %v2483
        %2548 = vst [vmem:[#allocation2 + $0x80] sm:$0xff] %v2484
        %2549 = vst [vmem:[#allocation2 + $0x88] sm:$0xff] %v2485
        %2550 = vst [vmem:[#allocation2 + $0x90] sm:$0xff] %v2486
        %2551 = vst [vmem:[#allocation2 + $0x98] sm:$0xff] %v2487
        %2552 = vst [vmem:[#allocation2 + $0xa0] sm:$0xff] %v2488
        %2553 = vst [vmem:[#allocation2 + $0xa8] sm:$0xff] %v2489
        %2554 = vst [vmem:[#allocation2 + $0xb0] sm:$0xff] %v2490
        %2555 = vst [vmem:[#allocation2 + $0xb8] sm:$0xff] %v2491
        %2556 = vst [vmem:[#allocation2 + $0xc0] sm:$0xff] %v2492
        %2557 = vst [vmem:[#allocation2 + $0xc8] sm:$0xff] %v2493
        %2558 = vst [vmem:[#allocation2 + $0xd0] sm:$0xff] %v2494
        %2559 = vst [vmem:[#allocation2 + $0xd8] sm:$0xff] %v2495
        %2560 = vst [vmem:[#allocation2 + $0xe0] sm:$0xff] %v2496
        %2561 = vst [vmem:[#allocation2 + $0xe8] sm:$0xff] %v2497
        %2562 = vst [vmem:[#allocation2 + $0xf0] sm:$0xff] %v2498
        %2563 = vst [vmem:[#allocation2 + $0xf8] sm:$0xff] %v2499
        %2564 = vst [vmem:[#allocation2 + $0x100] sm:$0xff] %v2500
        %2565 = vst [vmem:[#allocation2 + $0x108] sm:$0xff] %v2501
        %2566 = vst [vmem:[#allocation2 + $0x110] sm:$0xff] %v2502
        %2567 = vst [vmem:[#allocation2 + $0x118] sm:$0xff] %v2503
        %2568 = vst [vmem:[#allocation2 + $0x120] sm:$0xff] %v2504
        %2569 = vst [vmem:[#allocation2 + $0x128] sm:$0xff] %v2505
        %2570 = vst [vmem:[#allocation2 + $0x130] sm:$0xff] %v2506
        %2571 = vst [vmem:[#allocation2 + $0x138] sm:$0xff] %v2507
        %2572 = vst [vmem:[#allocation2 + $0x140] sm:$0xff] %v2508
        %2573 = vst [vmem:[#allocation2 + $0x148] sm:$0xff] %v2509
        %2574 = vst [vmem:[#allocation2 + $0x150] sm:$0xff] %v2510
        %2575 = vst [vmem:[#allocation2 + $0x158] sm:$0xff] %v2511
        %2576 = vst [vmem:[#allocation2 + $0x160] sm:$0xff] %v2512
        %2577 = vst [vmem:[#allocation2 + $0x168] sm:$0xff] %v2513
        %2578 = vst [vmem:[#allocation2 + $0x170] sm:$0xff] %v2514
        %2579 = vst [vmem:[#allocation2 + $0x178] sm:$0xff] %v2515
        %2580 = vst [vmem:[#allocation2 + $0x180] sm:$0xff] %v2516
        %2581 = vst [vmem:[#allocation2 + $0x188] sm:$0xff] %v2517
        %2582 = vst [vmem:[#allocation2 + $0x190] sm:$0xff] %v2518
        %2583 = vst [vmem:[#allocation2 + $0x198] sm:$0xff] %v2519
        %2584 = vst [vmem:[#allocation2 + $0x1a0] sm:$0xff] %v2520
        %2585 = vst [vmem:[#allocation2 + $0x1a8] sm:$0xff] %v2521
        %2586 = vst [vmem:[#allocation2 + $0x1b0] sm:$0xff] %v2522
        %2587 = vst [vmem:[#allocation2 + $0x1b8] sm:$0xff] %v2523
        %2588 = vst [vmem:[#allocation2 + $0x1c0] sm:$0xff] %v2524
        %2589 = vst [vmem:[#allocation2 + $0x1c8] sm:$0xff] %v2525
        %2590 = vst [vmem:[#allocation2 + $0x1d0] sm:$0xff] %v2526
        %2591 = vst [vmem:[#allocation2 + $0x1d8] sm:$0xff] %v2527
        %2592 = vst [vmem:[#allocation2 + $0x1e0] sm:$0xff] %v2528
        %2593 = vst [vmem:[#allocation2 + $0x1e8] sm:$0xff] %v2529
        %2594 = vst [vmem:[#allocation2 + $0x1f0] sm:$0xff] %v2530
        %2595 = vst [vmem:[#allocation2 + $0x1f8] sm:$0xff] %v2531
        %p2596 = scmp.eq.s32.totalorder %s28, 1
        // Predicated region
        $region49: #{ffn_forward.1} parent=31 // pred_check
          %p2597 = pneg %p2596
        $region50: #{ffn_forward.1} parent=31 // pred_check_branch
          %2599 = sbr.rel (%p2597) target = $region52
        $region51: #{ffn_forward.1} parent=31 // pred_region
          %v2600 = vld [vmem:[#allocation2] sm:$0xff]
          %v2601 = vld [vmem:[#allocation2 + $0x8] sm:$0xff]
          %v2602 = vld [vmem:[#allocation2 + $0x10] sm:$0xff]
          %v2603 = vld [vmem:[#allocation2 + $0x18] sm:$0xff]
          %v2604 = vld [vmem:[#allocation2 + $0x20] sm:$0xff]
          %v2605 = vld [vmem:[#allocation2 + $0x28] sm:$0xff]
          %v2606 = vld [vmem:[#allocation2 + $0x30] sm:$0xff]
          %v2607 = vld [vmem:[#allocation2 + $0x38] sm:$0xff]
          %v2608 = vld [vmem:[#allocation2 + $0x40] sm:$0xff]
          %v2609 = vld [vmem:[#allocation2 + $0x48] sm:$0xff]
          %v2610 = vld [vmem:[#allocation2 + $0x50] sm:$0xff]
          %v2611 = vld [vmem:[#allocation2 + $0x58] sm:$0xff]
          %v2612 = vld [vmem:[#allocation2 + $0x60] sm:$0xff]
          %v2613 = vld [vmem:[#allocation2 + $0x68] sm:$0xff]
          %v2614 = vld [vmem:[#allocation2 + $0x70] sm:$0xff]
          %v2615 = vld [vmem:[#allocation2 + $0x78] sm:$0xff]
          %v2616 = vld [vmem:[#allocation2 + $0x80] sm:$0xff]
          %v2617 = vld [vmem:[#allocation2 + $0x88] sm:$0xff]
          %v2618 = vld [vmem:[#allocation2 + $0x90] sm:$0xff]
          %v2619 = vld [vmem:[#allocation2 + $0x98] sm:$0xff]
          %v2620 = vld [vmem:[#allocation2 + $0xa0] sm:$0xff]
          %v2621 = vld [vmem:[#allocation2 + $0xa8] sm:$0xff]
          %v2622 = vld [vmem:[#allocation2 + $0xb0] sm:$0xff]
          %v2623 = vld [vmem:[#allocation2 + $0xb8] sm:$0xff]
          %v2624 = vld [vmem:[#allocation2 + $0xc0] sm:$0xff]
          %v2625 = vld [vmem:[#allocation2 + $0xc8] sm:$0xff]
          %v2626 = vld [vmem:[#allocation2 + $0xd0] sm:$0xff]
          %v2627 = vld [vmem:[#allocation2 + $0xd8] sm:$0xff]
          %v2628 = vld [vmem:[#allocation2 + $0xe0] sm:$0xff]
          %v2629 = vld [vmem:[#allocation2 + $0xe8] sm:$0xff]
          %v2630 = vld [vmem:[#allocation2 + $0xf0] sm:$0xff]
          %v2631 = vld [vmem:[#allocation2 + $0xf8] sm:$0xff]
          %v2632 = vld [vmem:[#allocation2 + $0x100] sm:$0xff]
          %v2633 = vld [vmem:[#allocation2 + $0x108] sm:$0xff]
          %v2634 = vld [vmem:[#allocation2 + $0x110] sm:$0xff]
          %v2635 = vld [vmem:[#allocation2 + $0x118] sm:$0xff]
          %v2636 = vld [vmem:[#allocation2 + $0x120] sm:$0xff]
          %v2637 = vld [vmem:[#allocation2 + $0x128] sm:$0xff]
          %v2638 = vld [vmem:[#allocation2 + $0x130] sm:$0xff]
          %v2639 = vld [vmem:[#allocation2 + $0x138] sm:$0xff]
          %v2640 = vld [vmem:[#allocation2 + $0x140] sm:$0xff]
          %v2641 = vld [vmem:[#allocation2 + $0x148] sm:$0xff]
          %v2642 = vld [vmem:[#allocation2 + $0x150] sm:$0xff]
          %v2643 = vld [vmem:[#allocation2 + $0x158] sm:$0xff]
          %v2644 = vld [vmem:[#allocation2 + $0x160] sm:$0xff]
          %v2645 = vld [vmem:[#allocation2 + $0x168] sm:$0xff]
          %v2646 = vld [vmem:[#allocation2 + $0x170] sm:$0xff]
          %v2647 = vld [vmem:[#allocation2 + $0x178] sm:$0xff]
          %v2648 = vld [vmem:[#allocation2 + $0x180] sm:$0xff]
          %v2649 = vld [vmem:[#allocation2 + $0x188] sm:$0xff]
          %v2650 = vld [vmem:[#allocation2 + $0x190] sm:$0xff]
          %v2651 = vld [vmem:[#allocation2 + $0x198] sm:$0xff]
          %v2652 = vld [vmem:[#allocation2 + $0x1a0] sm:$0xff]
          %v2653 = vld [vmem:[#allocation2 + $0x1a8] sm:$0xff]
          %v2654 = vld [vmem:[#allocation2 + $0x1b0] sm:$0xff]
          %v2655 = vld [vmem:[#allocation2 + $0x1b8] sm:$0xff]
          %v2656 = vld [vmem:[#allocation2 + $0x1c0] sm:$0xff]
          %v2657 = vld [vmem:[#allocation2 + $0x1c8] sm:$0xff]
          %v2658 = vld [vmem:[#allocation2 + $0x1d0] sm:$0xff]
          %v2659 = vld [vmem:[#allocation2 + $0x1d8] sm:$0xff]
          %v2660 = vld [vmem:[#allocation2 + $0x1e0] sm:$0xff]
          %v2661 = vld [vmem:[#allocation2 + $0x1e8] sm:$0xff]
          %v2662 = vld [vmem:[#allocation2 + $0x1f0] sm:$0xff]
          %v2663 = vld [vmem:[#allocation2 + $0x1f8] sm:$0xff]
          %2664 = vst [vmem:[%s279] sm:$0xff] %v2600
          %2665 = vst [vmem:[%s279 + $0x8] sm:$0xff] %v2601
          %2666 = vst [vmem:[%s279 + $0x10] sm:$0xff] %v2602
          %2667 = vst [vmem:[%s279 + $0x18] sm:$0xff] %v2603
          %2668 = vst [vmem:[%s279 + $0x20] sm:$0xff] %v2604
          %2669 = vst [vmem:[%s279 + $0x28] sm:$0xff] %v2605
          %2670 = vst [vmem:[%s279 + $0x30] sm:$0xff] %v2606
          %2671 = vst [vmem:[%s279 + $0x38] sm:$0xff] %v2607
          %2672 = vst [vmem:[%s279 + $0x40] sm:$0xff] %v2608
          %2673 = vst [vmem:[%s279 + $0x48] sm:$0xff] %v2609
          %2674 = vst [vmem:[%s279 + $0x50] sm:$0xff] %v2610
          %2675 = vst [vmem:[%s279 + $0x58] sm:$0xff] %v2611
          %2676 = vst [vmem:[%s279 + $0x60] sm:$0xff] %v2612
          %2677 = vst [vmem:[%s279 + $0x68] sm:$0xff] %v2613
          %2678 = vst [vmem:[%s279 + $0x70] sm:$0xff] %v2614
          %2679 = vst [vmem:[%s279 + $0x78] sm:$0xff] %v2615
          %2680 = vst [vmem:[%s279 + $0x80] sm:$0xff] %v2616
          %2681 = vst [vmem:[%s279 + $0x88] sm:$0xff] %v2617
          %2682 = vst [vmem:[%s279 + $0x90] sm:$0xff] %v2618
          %2683 = vst [vmem:[%s279 + $0x98] sm:$0xff] %v2619
          %2684 = vst [vmem:[%s279 + $0xa0] sm:$0xff] %v2620
          %2685 = vst [vmem:[%s279 + $0xa8] sm:$0xff] %v2621
          %2686 = vst [vmem:[%s279 + $0xb0] sm:$0xff] %v2622
          %2687 = vst [vmem:[%s279 + $0xb8] sm:$0xff] %v2623
          %2688 = vst [vmem:[%s279 + $0xc0] sm:$0xff] %v2624
          %2689 = vst [vmem:[%s279 + $0xc8] sm:$0xff] %v2625
          %2690 = vst [vmem:[%s279 + $0xd0] sm:$0xff] %v2626
          %2691 = vst [vmem:[%s279 + $0xd8] sm:$0xff] %v2627
          %2692 = vst [vmem:[%s279 + $0xe0] sm:$0xff] %v2628
          %2693 = vst [vmem:[%s279 + $0xe8] sm:$0xff] %v2629
          %2694 = vst [vmem:[%s279 + $0xf0] sm:$0xff] %v2630
          %2695 = vst [vmem:[%s279 + $0xf8] sm:$0xff] %v2631
          %2696 = vst [vmem:[%s279 + $0x100] sm:$0xff] %v2632
          %2697 = vst [vmem:[%s279 + $0x108] sm:$0xff] %v2633
          %2698 = vst [vmem:[%s279 + $0x110] sm:$0xff] %v2634
          %2699 = vst [vmem:[%s279 + $0x118] sm:$0xff] %v2635
          %2700 = vst [vmem:[%s279 + $0x120] sm:$0xff] %v2636
          %2701 = vst [vmem:[%s279 + $0x128] sm:$0xff] %v2637
          %2702 = vst [vmem:[%s279 + $0x130] sm:$0xff] %v2638
          %2703 = vst [vmem:[%s279 + $0x138] sm:$0xff] %v2639
          %2704 = vst [vmem:[%s279 + $0x140] sm:$0xff] %v2640
          %2705 = vst [vmem:[%s279 + $0x148] sm:$0xff] %v2641
          %2706 = vst [vmem:[%s279 + $0x150] sm:$0xff] %v2642
          %2707 = vst [vmem:[%s279 + $0x158] sm:$0xff] %v2643
          %2708 = vst [vmem:[%s279 + $0x160] sm:$0xff] %v2644
          %2709 = vst [vmem:[%s279 + $0x168] sm:$0xff] %v2645
          %2710 = vst [vmem:[%s279 + $0x170] sm:$0xff] %v2646
          %2711 = vst [vmem:[%s279 + $0x178] sm:$0xff] %v2647
          %2712 = vst [vmem:[%s279 + $0x180] sm:$0xff] %v2648
          %2713 = vst [vmem:[%s279 + $0x188] sm:$0xff] %v2649
          %2714 = vst [vmem:[%s279 + $0x190] sm:$0xff] %v2650
          %2715 = vst [vmem:[%s279 + $0x198] sm:$0xff] %v2651
          %2716 = vst [vmem:[%s279 + $0x1a0] sm:$0xff] %v2652
          %2717 = vst [vmem:[%s279 + $0x1a8] sm:$0xff] %v2653
          %2718 = vst [vmem:[%s279 + $0x1b0] sm:$0xff] %v2654
          %2719 = vst [vmem:[%s279 + $0x1b8] sm:$0xff] %v2655
          %2720 = vst [vmem:[%s279 + $0x1c0] sm:$0xff] %v2656
          %2721 = vst [vmem:[%s279 + $0x1c8] sm:$0xff] %v2657
          %2722 = vst [vmem:[%s279 + $0x1d0] sm:$0xff] %v2658
          %2723 = vst [vmem:[%s279 + $0x1d8] sm:$0xff] %v2659
          %2724 = vst [vmem:[%s279 + $0x1e0] sm:$0xff] %v2660
          %2725 = vst [vmem:[%s279 + $0x1e8] sm:$0xff] %v2661
          %2726 = vst [vmem:[%s279 + $0x1f0] sm:$0xff] %v2662
          %2727 = vst [vmem:[%s279 + $0x1f8] sm:$0xff] %v2663
        $region52: #{ffn_forward.1} parent=31 // pred_fallthru
          _
        %s2728 = sand.u32 %s121, 1
        %s2729 = scalar_lea.sflag [#allocation5], %s2728
        %s2730 = sand.u32 %s121, 1
        %s2731 = smul.addr %s2730, 512
        %s2732 = scalar_lea.vmem [#allocation9], %s2731
        // Predicated region
        $region53: #{ffn_forward.1} parent=31 // pred_check
          %p2733 = pneg %p131
        $region54: #{ffn_forward.1} parent=31 // pred_check_branch
          %2735 = sbr.rel (%p2733) target = $region56
        $region55: #{ffn_forward.1} parent=31 // pred_region
          %s2736 = smul.u32 32, %s27
          %s2738 = ssub.s32 8192, 8192
          %2739 = vsyncadd %s2729, %s2738
          %s2740 = smul.addr %s2736, 2
          %s2741 = smul.addr %s2740, 128
          %s2742 = scalar_lea.hbm %s3, %s2741
          %s2743 = sshll.u32 %s2732, 4
          %s2744 = int_to_ptr.vmem [resolvable:$true] %s2743
          %2749 = dma.vmem_to_hbm [thread:$0]  %s2744, 8192, %s2742, %s2729, 256, 256, 16
        $region56: #{ffn_forward.1} parent=31 // pred_fallthru
          _
      $region32: #{ffn_forward.1} parent=5 // pred_fallthru
        _
      %p2750 = scmp.le.s32.totalorder 2, %s18
      // Predicated region
      $region57: #{ffn_forward.1} parent=5 // pred_check
        %p2751 = pneg %p2750
      $region58: #{ffn_forward.1} parent=5 // pred_check_branch
        %2753 = sbr.rel (%p2751) target = $region60
      $region59: #{ffn_forward.1} parent=5 // pred_region
        %s2754 = ssub.s32 %s18, 2
        // Predicated region
        $region61: #{ffn_forward.1} parent=59 // pred_check
          %p2755 = pneg %p137
        $region62: #{ffn_forward.1} parent=59 // pred_check_branch
          %2757 = sbr.rel (%p2755) target = $region64
        $region63: #{ffn_forward.1} parent=59 // pred_region
          %s2758 = sand.u32 %s122, 1
          %s2759 = scalar_lea.sflag [#allocation5], %s2758
          %s2760 = sand.u32 %s122, 1
          %s2761 = smul.addr %s2760, 512
          %s2762 = scalar_lea.vmem [#allocation9], %s2761
          %2763 = dma.done %s2759, 8192
        $region64: #{ffn_forward.1} parent=59 // pred_fallthru
          _
      $region60: #{ffn_forward.1} parent=5 // pred_fallthru
        _
    $region6: #{ffn_forward.1} parent=1 // loop_footer
      %s22 = sadd.s32 1, %s18
    $region7: #{ffn_forward.1} parent=1 // loop_footer_branch
      %17 = sbr.rel target = $region3
    $region8: #{ffn_forward.1} parent=1 // loop_exit
      _
    %2764 = vsyncpa [#allocation4], 1
    %s2765 = scalar_lea.sflag [#allocation4], 1
    %2766 = vsyncpa %s2765, 1
    %2767 = vsyncpa [#allocation7], 1
    %s2768 = scalar_lea.sflag [#allocation7], 1
    %2769 = vsyncpa %s2768, 1
    %2770 = vsyncpa [#allocation5], 1
    %s2771 = scalar_lea.sflag [#allocation5], 1
    %2772 = vsyncpa %s2771, 1

</llo_original>
